<compile_context>
chip_gen: v6e
topology: v6e:2x2x1
jax: 0.10.0
libtpu: 0.0.40
codegen_flags: <defaults>
</compile_context>

<pallas_src>
import functools

import jax
import jax.numpy as jnp
import numpy as np
from jax import lax
from jax.experimental import pallas as pl
from jax.experimental.pallas import tpu as pltpu


def _encoder_layer_kernel(
    lens_ref,                                   # scalar prefetch: (B,) int32 in SMEM
    x_ref,                                      # (S, H) activations of this batch row
    wq_ref, bq_ref, wk_ref, bk_ref, wv_ref, bv_ref,   # head-major projections (bf16/f32)
    wo_ref, bo_ref,                             # output projection
    w1_ref, b1_ref, w2_ref, b2_ref,             # feed-forward
    g1_ref, be1_ref, g2_ref, be2_ref,           # LayerNorm params
    o_ref,                                      # (tq, H) output block
    *, hidden, n_heads, d_k, eps, tq, tk, n_k_chunks,
):
    f32, bf16 = jnp.float32, jnp.bfloat16
    S = x_ref.shape[0]
    batch_idx = pl.program_id(0)
    seq_len = lens_ref[batch_idx]               # number of valid (unmasked) keys
    inv_scale = 1.0 / float(np.sqrt(d_k))

    def layer_norm(v, g, b):
        # BERT-pytorch LayerNorm: unbiased std (divide by n-1), eps added to std.
        mean = jnp.mean(v, axis=-1, keepdims=True)
        d = v - mean
        var = jnp.sum(d * d, axis=-1, keepdims=True) * (1.0 / (hidden - 1))
        return g * (d / (jnp.sqrt(var) + eps)) + b

    # ---------------- attention sublayer (pre-norm residual) -----------------
    x_full = x_ref[...].astype(f32)                        # (S, H)
    g1 = g1_ref[...]
    be1 = be1_ref[...]
    xn_full = layer_norm(x_full, g1, be1)                  # f32

    # Head-major K / V for the full sequence: (n_heads, S, d_k), f32 accum.
    xn_full_b = jnp.broadcast_to(xn_full.astype(bf16)[None], (n_heads, S, hidden))
    kh = jnp.einsum("hsK,hdK->hsd", xn_full_b, wk_ref[...],
                    preferred_element_type=f32) + bk_ref[...]
    vh = jnp.einsum("hsK,hdK->hsd", xn_full_b, wv_ref[...],
                    preferred_element_type=f32) + bv_ref[...]
    kh_b = kh.astype(bf16)
    vh_b = vh.astype(bf16)

    # Query block handled by this grid step.
    if tq == S:
        x_q, xn_q = x_full, xn_full
    else:
        q0 = pl.multiple_of(pl.program_id(1) * tq, tq)
        x_q = x_ref[pl.ds(q0, tq), :].astype(f32)
        xn_q = layer_norm(x_q, g1, be1)
    xn_q_b = jnp.broadcast_to(xn_q.astype(bf16)[None], (n_heads, tq, hidden))
    qh = jnp.einsum("hqK,hdK->hqd", xn_q_b, wq_ref[...],
                    preferred_element_type=f32) + bq_ref[...]
    qh_b = (qh * inv_scale).astype(bf16)                   # (n_heads, tq, d_k)

    # Flash-style online softmax over key chunks (static unroll; f32 stats).
    m_i = jnp.full((n_heads, tq, 1), -jnp.inf, f32)
    l_i = jnp.zeros((n_heads, tq, 1), f32)
    acc = jnp.zeros((n_heads, tq, d_k), f32)
    for c in range(n_k_chunks):
        if n_k_chunks == 1:
            k_c, v_c = kh_b, vh_b
        else:
            k_c = kh_b[:, c * tk:(c + 1) * tk, :]
            v_c = vh_b[:, c * tk:(c + 1) * tk, :]
        sc = jnp.einsum("hqd,hkd->hqk", qh_b, k_c,
                        preferred_element_type=f32)        # (n_heads, tq, tk)
        key_pos = lax.broadcasted_iota(jnp.int32, (n_heads, tq, tk), 2) + c * tk
        sc = jnp.where(key_pos >= seq_len, -1e9, sc)       # padding (key) mask
        m_new = jnp.maximum(m_i, jnp.max(sc, axis=-1, keepdims=True))
        alpha = jnp.exp(m_i - m_new)
        p = jnp.exp(sc - m_new)
        l_i = alpha * l_i + jnp.sum(p, axis=-1, keepdims=True)
        acc = alpha * acc + jnp.einsum("hqk,hkd->hqd", p.astype(bf16), v_c,
                                       preferred_element_type=f32)
        m_i = m_new

    ctx = acc * pl.reciprocal(l_i, approx=True)            # (n_heads, tq, d_k)

    # Output projection summed over heads (no lane-axis concatenate).
    partial = jnp.einsum("hqd,hdE->hqE", ctx.astype(bf16), wo_ref[...],
                         preferred_element_type=f32)       # (n_heads, tq, H)
    attn = partial[0]
    for h in range(1, n_heads):
        attn = attn + partial[h]
    attn = attn + bo_ref[...]
    # TODO(synk): attention / sublayer / output dropout omitted (eval mode, p = 0).
    x1 = x_q + attn

    # ---------------- position-wise feed-forward sublayer --------------------
    xn2 = layer_norm(x1, g2_ref[...], be2_ref[...])
    h1 = jnp.dot(xn2.astype(bf16), w1_ref[...],
                 preferred_element_type=f32) + b1_ref[...]
    cg = 0.7978845608028654                                # sqrt(2/pi), tanh GELU
    gelu = 0.5 * h1 * (1.0 + jnp.tanh(cg * (h1 + 0.044715 * h1 * h1 * h1)))
    ff = jnp.dot(gelu.astype(bf16), w2_ref[...],
                 preferred_element_type=f32) + b2_ref[...]

    o_ref[...] = (x1 + ff).astype(o_ref.dtype)


def _pick_tile(n, target):
    """Largest tile <= target that divides n and is a multiple of 8 (else n)."""
    if n <= target:
        return n
    for t in range(target, 7, -1):
        if n % t == 0 and t % 8 == 0:
            return t
    return n


def transformer_encoder_layer(x, lengths, params, *, n_heads,
                              q_block=256, k_block=512, eps=1e-6):
    """Pre-norm transformer encoder layer (BERT-pytorch semantics), eval mode.

    x:        (B, S, H) activations.
    lengths:  (B,) int32 number of valid key positions per batch row
              (padding-style mask: keys >= lengths[b] are masked out).
    params:   dict of f32 weights in (in_features, out_features) layout.
    """
    # TODO(synk): only padding-style (per-batch key length) masks are supported;
    # arbitrary (B, S, S) masks would need a dense mask input path.
    B, S, H = x.shape
    F = params["w1"].shape[1]
    assert H % n_heads == 0
    d_k = H // n_heads

    tq = _pick_tile(S, q_block)
    tk = _pick_tile(S, k_block)
    n_q_blocks = S // tq
    n_k_chunks = S // tk

    bf16, f32 = jnp.bfloat16, jnp.float32
    # Head-major bf16 projection weights: [head, d_k, features].
    wq_h = params["wq"].T.reshape(n_heads, d_k, H).astype(bf16)
    wk_h = params["wk"].T.reshape(n_heads, d_k, H).astype(bf16)
    wv_h = params["wv"].T.reshape(n_heads, d_k, H).astype(bf16)
    wo_h = params["wo"].reshape(n_heads, d_k, H).astype(bf16)
    bq_h = params["bq"].reshape(n_heads, 1, d_k).astype(f32)
    bk_h = params["bk"].reshape(n_heads, 1, d_k).astype(f32)
    bv_h = params["bv"].reshape(n_heads, 1, d_k).astype(f32)
    w1 = params["w1"].astype(bf16)
    w2 = params["w2"].astype(bf16)

    kern = functools.partial(
        _encoder_layer_kernel, hidden=H, n_heads=n_heads, d_k=d_k, eps=eps,
        tq=tq, tk=tk, n_k_chunks=n_k_chunks)

    def _resident(shape):
        # Constant block index => fetched once, stays VMEM-resident across steps.
        nd = len(shape)
        return pl.BlockSpec(shape, lambda b, q, lens, _nd=nd: (0,) * _nd)

    in_specs = [
        pl.BlockSpec((None, S, H), lambda b, q, lens: (b, 0, 0)),    # x (full seq)
        _resident((n_heads, d_k, H)), _resident((n_heads, 1, d_k)),  # wq, bq
        _resident((n_heads, d_k, H)), _resident((n_heads, 1, d_k)),  # wk, bk
        _resident((n_heads, d_k, H)), _resident((n_heads, 1, d_k)),  # wv, bv
        _resident((n_heads, d_k, H)), _resident((1, H)),             # wo, bo
        _resident((H, F)), _resident((1, F)),                        # w1, b1
        _resident((F, H)), _resident((1, H)),                        # w2, b2
        _resident((1, H)), _resident((1, H)),                        # ln1 gamma/beta
        _resident((1, H)), _resident((1, H)),                        # ln2 gamma/beta
    ]
    out_spec = pl.BlockSpec((None, tq, H), lambda b, q, lens: (b, q, 0))

    return pl.pallas_call(
        kern,
        out_shape=jax.ShapeDtypeStruct((B, S, H), x.dtype),
        grid_spec=pltpu.PrefetchScalarGridSpec(
            num_scalar_prefetch=1,
            grid=(B, n_q_blocks),
            in_specs=in_specs,
            out_specs=out_spec,
        ),
        compiler_params=pltpu.CompilerParams(
            dimension_semantics=("parallel", "parallel"),
            vmem_limit_bytes=48 * 1024 * 1024,
        ),
    )(lengths.astype(jnp.int32), x,
      wq_h, bq_h, wk_h, bk_h, wv_h, bv_h, wo_h, params["bo"].astype(f32),
      w1, params["b1"].astype(f32), w2, params["b2"].astype(f32),
      params["g1"].astype(f32), params["be1"].astype(f32),
      params["g2"].astype(f32), params["be2"].astype(f32))


# ----------------------------- pure-JAX reference -----------------------------
def ref_layer(x, lengths, p, n_heads, eps=1e-6):
    B, S, H = x.shape
    d_k = H // n_heads

    def ln(v, g, b):
        mean = v.mean(-1, keepdims=True)
        d = v - mean
        std = jnp.sqrt((d * d).sum(-1, keepdims=True) / (H - 1))
        return g * d / (std + eps) + b

    key_valid = jnp.arange(S)[None, :] < lengths[:, None]          # (B, S)

    xn = ln(x, p["g1"], p["be1"])
    q = xn @ p["wq"] + p["bq"]
    k = xn @ p["wk"] + p["bk"]
    v = xn @ p["wv"] + p["bv"]
    qh = q.reshape(B, S, n_heads, d_k).transpose(0, 2, 1, 3)
    kh = k.reshape(B, S, n_heads, d_k).transpose(0, 2, 1, 3)
    vh = v.reshape(B, S, n_heads, d_k).transpose(0, 2, 1, 3)
    sc = jnp.einsum("bhqd,bhkd->bhqk", qh, kh) / np.sqrt(d_k)
    sc = jnp.where(key_valid[:, None, None, :], sc, -1e9)
    pa = jax.nn.softmax(sc, axis=-1)
    ctx = jnp.einsum("bhqk,bhkd->bhqd", pa, vh)
    ctx = ctx.transpose(0, 2, 1, 3).reshape(B, S, H)
    x = x + (ctx @ p["wo"] + p["bo"])

    xn2 = ln(x, p["g2"], p["be2"])
    h1 = xn2 @ p["w1"] + p["b1"]
    c = 0.7978845608028654
    g = 0.5 * h1 * (1.0 + jnp.tanh(c * (h1 + 0.044715 * h1 ** 3)))
    return x + (g @ p["w2"] + p["b2"])


if __name__ == "__main__":
    B, S, H, HEADS, F = 2, 8, 32, 4, 128   # hidden=32, attn_heads=4, ff=4*hidden

    key = jax.random.PRNGKey(0)
    ks = jax.random.split(key, 16)
    sw = 0.05
    params = {
        "wq": jax.random.normal(ks[0], (H, H), jnp.float32) * sw,
        "bq": jax.random.normal(ks[1], (1, H), jnp.float32) * 0.02,
        "wk": jax.random.normal(ks[2], (H, H), jnp.float32) * sw,
        "bk": jax.random.normal(ks[3], (1, H), jnp.float32) * 0.02,
        "wv": jax.random.normal(ks[4], (H, H), jnp.float32) * sw,
        "bv": jax.random.normal(ks[5], (1, H), jnp.float32) * 0.02,
        "wo": jax.random.normal(ks[6], (H, H), jnp.float32) * sw,
        "bo": jax.random.normal(ks[7], (1, H), jnp.float32) * 0.02,
        "w1": jax.random.normal(ks[8], (H, F), jnp.float32) * sw,
        "b1": jax.random.normal(ks[9], (1, F), jnp.float32) * 0.02,
        "w2": jax.random.normal(ks[10], (F, H), jnp.float32) * sw,
        "b2": jax.random.normal(ks[11], (1, H), jnp.float32) * 0.02,
        "g1": 1.0 + 0.1 * jax.random.normal(ks[12], (1, H), jnp.float32),
        "be1": 0.05 * jax.random.normal(ks[13], (1, H), jnp.float32),
        "g2": 1.0 + 0.1 * jax.random.normal(ks[14], (1, H), jnp.float32),
        "be2": 0.05 * jax.random.normal(ks[15], (1, H), jnp.float32),
    }

    x = jax.random.normal(jax.random.PRNGKey(1), (B, S, H), jnp.float32)
    # Padding-style mask: batch 0 fully valid, batch 1 has its last 2 keys masked.
    lengths = jnp.array([S, S - 2], dtype=jnp.int32)

    out = transformer_encoder_layer(x, lengths, params, n_heads=HEADS)
    out = jax.block_until_ready(out)

    ref = ref_layer(x, lengths, params, HEADS)
    assert out.shape == (B, S, H) and out.dtype == jnp.float32
    np.testing.assert_allclose(np.asarray(out), np.asarray(ref),
                               atol=2e-2, rtol=2e-2)

    print("KERNEL_OK")
</pallas_src>

<mosaic_0001>
module attributes {stable_mosaic.version = 11 : i64} {
  func.func @_encoder_layer_kernel(%arg0: i32, %arg1: i32, %arg2: memref<2xi32, #tpu.memory_space<smem>>, %arg3: memref<1x8x32xf32, #tpu.memory_space<vmem>>, %arg4: memref<4x8x32xbf16, #tpu.memory_space<vmem>>, %arg5: memref<4x1x8xf32, #tpu.memory_space<vmem>>, %arg6: memref<4x8x32xbf16, #tpu.memory_space<vmem>>, %arg7: memref<4x1x8xf32, #tpu.memory_space<vmem>>, %arg8: memref<4x8x32xbf16, #tpu.memory_space<vmem>>, %arg9: memref<4x1x8xf32, #tpu.memory_space<vmem>>, %arg10: memref<4x8x32xbf16, #tpu.memory_space<vmem>>, %arg11: memref<1x32xf32, #tpu.memory_space<vmem>>, %arg12: memref<32x128xbf16, #tpu.memory_space<vmem>>, %arg13: memref<1x128xf32, #tpu.memory_space<vmem>>, %arg14: memref<128x32xbf16, #tpu.memory_space<vmem>>, %arg15: memref<1x32xf32, #tpu.memory_space<vmem>>, %arg16: memref<1x32xf32, #tpu.memory_space<vmem>>, %arg17: memref<1x32xf32, #tpu.memory_space<vmem>>, %arg18: memref<1x32xf32, #tpu.memory_space<vmem>>, %arg19: memref<1x32xf32, #tpu.memory_space<vmem>>, %arg20: memref<1x8x32xf32, #tpu.memory_space<vmem>>) attributes {dimension_semantics = [#tpu.dimension_semantics<parallel>, #tpu.dimension_semantics<parallel>], iteration_bounds = array<i64: 2, 1>, scalar_prefetch = 1 : i64, scratch_operands = 0 : i64, tpu.core_type = #tpu.core_type<tc>, window_params = [{transform_indices = @transform_0, window_bounds = array<i64: 1, 8, 32>}, {pipeline_mode = #tpu.pipeline_mode<synchronous>, transform_indices = @transform_1, window_bounds = array<i64: 4, 8, 32>}, {pipeline_mode = #tpu.pipeline_mode<synchronous>, transform_indices = @transform_2, window_bounds = array<i64: 4, 1, 8>}, {pipeline_mode = #tpu.pipeline_mode<synchronous>, transform_indices = @transform_3, window_bounds = array<i64: 4, 8, 32>}, {pipeline_mode = #tpu.pipeline_mode<synchronous>, transform_indices = @transform_4, window_bounds = array<i64: 4, 1, 8>}, {pipeline_mode = #tpu.pipeline_mode<synchronous>, transform_indices = @transform_5, window_bounds = array<i64: 4, 8, 32>}, {pipeline_mode = #tpu.pipeline_mode<synchronous>, transform_indices = @transform_6, window_bounds = array<i64: 4, 1, 8>}, {pipeline_mode = #tpu.pipeline_mode<synchronous>, transform_indices = @transform_7, window_bounds = array<i64: 4, 8, 32>}, {pipeline_mode = #tpu.pipeline_mode<synchronous>, transform_indices = @transform_8, window_bounds = array<i64: 1, 32>}, {pipeline_mode = #tpu.pipeline_mode<synchronous>, transform_indices = @transform_9, window_bounds = array<i64: 32, 128>}, {pipeline_mode = #tpu.pipeline_mode<synchronous>, transform_indices = @transform_10, window_bounds = array<i64: 1, 128>}, {pipeline_mode = #tpu.pipeline_mode<synchronous>, transform_indices = @transform_11, window_bounds = array<i64: 128, 32>}, {pipeline_mode = #tpu.pipeline_mode<synchronous>, transform_indices = @transform_12, window_bounds = array<i64: 1, 32>}, {pipeline_mode = #tpu.pipeline_mode<synchronous>, transform_indices = @transform_13, window_bounds = array<i64: 1, 32>}, {pipeline_mode = #tpu.pipeline_mode<synchronous>, transform_indices = @transform_14, window_bounds = array<i64: 1, 32>}, {pipeline_mode = #tpu.pipeline_mode<synchronous>, transform_indices = @transform_15, window_bounds = array<i64: 1, 32>}, {pipeline_mode = #tpu.pipeline_mode<synchronous>, transform_indices = @transform_16, window_bounds = array<i64: 1, 32>}, {transform_indices = @transform_17, window_bounds = array<i64: 1, 8, 32>}]} {
    %0 = arith.index_cast %arg0 : i32 to index
    %1 = memref.load %arg2[%0] : memref<2xi32, #tpu.memory_space<smem>>
    %c0 = arith.constant 0 : index
    %c0_0 = arith.constant 0 : index
    %c0_1 = arith.constant 0 : index
    %2 = vector.load %arg3[%c0, %c0_0, %c0_1] : memref<1x8x32xf32, #tpu.memory_space<vmem>>, vector<1x8x32xf32>
    %3 = vector.shape_cast %2 : vector<1x8x32xf32> to vector<8x32xf32>
    %c0_2 = arith.constant 0 : index
    %c0_3 = arith.constant 0 : index
    %4 = vector.load %arg16[%c0_2, %c0_3] : memref<1x32xf32, #tpu.memory_space<vmem>>, vector<1x32xf32>
    %c0_4 = arith.constant 0 : index
    %c0_5 = arith.constant 0 : index
    %5 = vector.load %arg17[%c0_4, %c0_5] : memref<1x32xf32, #tpu.memory_space<vmem>>, vector<1x32xf32>
    %cst = arith.constant dense<0.000000e+00> : vector<8xf32>
    %6 = vector.multi_reduction <add>, %3, %cst [1] : vector<8x32xf32> to vector<8xf32>
    %7 = vector.shape_cast %6 : vector<8xf32> to vector<8x1xf32>
    %cst_6 = arith.constant 3.200000e+01 : f32
    %8 = vector.broadcast %cst_6 : f32 to vector<8x1xf32>
    %9 = arith.divf %7, %8 : vector<8x1xf32>
    %10 = vector.broadcast %9 : vector<8x1xf32> to vector<8x32xf32>
    %11 = arith.subf %3, %10 : vector<8x32xf32>
    %12 = arith.mulf %11, %11 : vector<8x32xf32>
    %cst_7 = arith.constant dense<0.000000e+00> : vector<8xf32>
    %13 = vector.multi_reduction <add>, %12, %cst_7 [1] : vector<8x32xf32> to vector<8xf32>
    %14 = vector.shape_cast %13 : vector<8xf32> to vector<8x1xf32>
    %cst_8 = arith.constant 0.0322580636 : f32
    %15 = vector.broadcast %cst_8 : f32 to vector<8x1xf32>
    %16 = arith.mulf %14, %15 : vector<8x1xf32>
    %17 = math.sqrt %16 : vector<8x1xf32>
    %cst_9 = arith.constant 9.99999997E-7 : f32
    %18 = vector.broadcast %cst_9 : f32 to vector<8x1xf32>
    %19 = arith.addf %17, %18 : vector<8x1xf32>
    %20 = vector.broadcast %19 : vector<8x1xf32> to vector<8x32xf32>
    %21 = arith.divf %11, %20 : vector<8x32xf32>
    %22 = vector.broadcast %4 : vector<1x32xf32> to vector<8x32xf32>
    %23 = arith.mulf %22, %21 : vector<8x32xf32>
    %24 = vector.broadcast %5 : vector<1x32xf32> to vector<8x32xf32>
    %25 = arith.addf %23, %24 : vector<8x32xf32>
    %26 = arith.truncf %25 : vector<8x32xf32> to vector<8x32xbf16>
    %27 = vector.shape_cast %26 : vector<8x32xbf16> to vector<1x8x32xbf16>
    %28 = vector.shape_cast %27 : vector<1x8x32xbf16> to vector<1x8x32xbf16>
    %29 = vector.broadcast %28 : vector<1x8x32xbf16> to vector<4x8x32xbf16>
    %c0_10 = arith.constant 0 : index
    %c0_11 = arith.constant 0 : index
    %c0_12 = arith.constant 0 : index
    %30 = vector.load %arg6[%c0_10, %c0_11, %c0_12] : memref<4x8x32xbf16, #tpu.memory_space<vmem>>, vector<4x8x32xbf16>
    "tpu.trace_start"() <{level = 10 : i32, message = "hsK,hdK->hsd"}> : () -> ()
    %cst_13 = arith.constant dense<0.000000e+00> : vector<4x8x8xf32>
    %31 = tpu.matmul %29, %30, %cst_13 {dimension_numbers = #tpu.dot_dimension_numbers<[2], [2], [1], [1], [0, 0, 0, 1, 1, 1], [0], [0]>} : vector<4x8x32xbf16>, vector<4x8x32xbf16>, vector<4x8x8xf32> -> vector<4x8x8xf32>
    "tpu.trace_stop"() : () -> ()
    %c0_14 = arith.constant 0 : index
    %c0_15 = arith.constant 0 : index
    %c0_16 = arith.constant 0 : index
    %32 = vector.load %arg7[%c0_14, %c0_15, %c0_16] : memref<4x1x8xf32, #tpu.memory_space<vmem>>, vector<4x1x8xf32>
    %33 = vector.broadcast %32 : vector<4x1x8xf32> to vector<4x8x8xf32>
    %34 = arith.addf %31, %33 : vector<4x8x8xf32>
    %c0_17 = arith.constant 0 : index
    %c0_18 = arith.constant 0 : index
    %c0_19 = arith.constant 0 : index
    %35 = vector.load %arg8[%c0_17, %c0_18, %c0_19] : memref<4x8x32xbf16, #tpu.memory_space<vmem>>, vector<4x8x32xbf16>
    "tpu.trace_start"() <{level = 10 : i32, message = "hsK,hdK->hsd"}> : () -> ()
    %cst_20 = arith.constant dense<0.000000e+00> : vector<4x8x8xf32>
    %36 = tpu.matmul %29, %35, %cst_20 {dimension_numbers = #tpu.dot_dimension_numbers<[2], [2], [1], [1], [0, 0, 0, 1, 1, 1], [0], [0]>} : vector<4x8x32xbf16>, vector<4x8x32xbf16>, vector<4x8x8xf32> -> vector<4x8x8xf32>
    "tpu.trace_stop"() : () -> ()
    %c0_21 = arith.constant 0 : index
    %c0_22 = arith.constant 0 : index
    %c0_23 = arith.constant 0 : index
    %37 = vector.load %arg9[%c0_21, %c0_22, %c0_23] : memref<4x1x8xf32, #tpu.memory_space<vmem>>, vector<4x1x8xf32>
    %38 = vector.broadcast %37 : vector<4x1x8xf32> to vector<4x8x8xf32>
    %39 = arith.addf %36, %38 : vector<4x8x8xf32>
    %40 = arith.truncf %34 : vector<4x8x8xf32> to vector<4x8x8xbf16>
    %41 = arith.truncf %39 : vector<4x8x8xf32> to vector<4x8x8xbf16>
    %42 = arith.truncf %25 : vector<8x32xf32> to vector<8x32xbf16>
    %43 = vector.shape_cast %42 : vector<8x32xbf16> to vector<1x8x32xbf16>
    %44 = vector.shape_cast %43 : vector<1x8x32xbf16> to vector<1x8x32xbf16>
    %45 = vector.broadcast %44 : vector<1x8x32xbf16> to vector<4x8x32xbf16>
    %c0_24 = arith.constant 0 : index
    %c0_25 = arith.constant 0 : index
    %c0_26 = arith.constant 0 : index
    %46 = vector.load %arg4[%c0_24, %c0_25, %c0_26] : memref<4x8x32xbf16, #tpu.memory_space<vmem>>, vector<4x8x32xbf16>
    "tpu.trace_start"() <{level = 10 : i32, message = "hqK,hdK->hqd"}> : () -> ()
    %cst_27 = arith.constant dense<0.000000e+00> : vector<4x8x8xf32>
    %47 = tpu.matmul %45, %46, %cst_27 {dimension_numbers = #tpu.dot_dimension_numbers<[2], [2], [1], [1], [0, 0, 0, 1, 1, 1], [0], [0]>} : vector<4x8x32xbf16>, vector<4x8x32xbf16>, vector<4x8x8xf32> -> vector<4x8x8xf32>
    "tpu.trace_stop"() : () -> ()
    %c0_28 = arith.constant 0 : index
    %c0_29 = arith.constant 0 : index
    %c0_30 = arith.constant 0 : index
    %48 = vector.load %arg5[%c0_28, %c0_29, %c0_30] : memref<4x1x8xf32, #tpu.memory_space<vmem>>, vector<4x1x8xf32>
    %49 = vector.broadcast %48 : vector<4x1x8xf32> to vector<4x8x8xf32>
    %50 = arith.addf %47, %49 : vector<4x8x8xf32>
    %cst_31 = arith.constant 0.353553385 : f32
    %51 = vector.broadcast %cst_31 : f32 to vector<4x8x8xf32>
    %52 = arith.mulf %50, %51 : vector<4x8x8xf32>
    %53 = arith.truncf %52 : vector<4x8x8xf32> to vector<4x8x8xbf16>
    %cst_32 = arith.constant 0xFF800000 : f32
    %54 = vector.broadcast %cst_32 : f32 to vector<4x8x1xf32>
    %cst_33 = arith.constant 0.000000e+00 : f32
    %55 = vector.broadcast %cst_33 : f32 to vector<4x8x1xf32>
    %cst_34 = arith.constant 0.000000e+00 : f32
    %56 = vector.broadcast %cst_34 : f32 to vector<4x8x8xf32>
    "tpu.trace_start"() <{level = 10 : i32, message = "hqd,hkd->hqk"}> : () -> ()
    %cst_35 = arith.constant dense<0.000000e+00> : vector<4x8x8xf32>
    %57 = tpu.matmul %53, %40, %cst_35 {dimension_numbers = #tpu.dot_dimension_numbers<[2], [2], [1], [1], [0, 0, 0, 1, 1, 1], [0], [0]>} : vector<4x8x8xbf16>, vector<4x8x8xbf16>, vector<4x8x8xf32> -> vector<4x8x8xf32>
    "tpu.trace_stop"() : () -> ()
    %58 = tpu.iota {dimensions = array<i32: 2>} : vector<4x8x8xi32>
    %c0_i32 = arith.constant 0 : i32
    %59 = vector.broadcast %c0_i32 : i32 to vector<4x8x8xi32>
    %60 = arith.addi %58, %59 : vector<4x8x8xi32>
    %61 = vector.broadcast %1 : i32 to vector<4x8x8xi32>
    %62 = arith.cmpi sge, %60, %61 : vector<4x8x8xi32>
    %cst_36 = arith.constant -1.000000e+09 : f32
    %63 = vector.broadcast %cst_36 : f32 to vector<4x8x8xf32>
    %64 = arith.select %62, %63, %57 : vector<4x8x8xi1>, vector<4x8x8xf32>
    %cst_37 = arith.constant dense<0xFF800000> : vector<4x8xf32>
    %65 = vector.multi_reduction <maximumf>, %64, %cst_37 [2] : vector<4x8x8xf32> to vector<4x8xf32>
    %66 = vector.shape_cast %65 : vector<4x8xf32> to vector<4x8x1xf32>
    %67 = arith.maximumf %54, %66 : vector<4x8x1xf32>
    %68 = arith.subf %54, %67 : vector<4x8x1xf32>
    %69 = math.exp %68 : vector<4x8x1xf32>
    %70 = vector.broadcast %67 : vector<4x8x1xf32> to vector<4x8x8xf32>
    %71 = arith.subf %64, %70 : vector<4x8x8xf32>
    %72 = math.exp %71 : vector<4x8x8xf32>
    %73 = arith.mulf %69, %55 : vector<4x8x1xf32>
    %cst_38 = arith.constant dense<0.000000e+00> : vector<4x8xf32>
    %74 = vector.multi_reduction <add>, %72, %cst_38 [2] : vector<4x8x8xf32> to vector<4x8xf32>
    %75 = vector.shape_cast %74 : vector<4x8xf32> to vector<4x8x1xf32>
    %76 = arith.addf %73, %75 : vector<4x8x1xf32>
    %77 = vector.broadcast %69 : vector<4x8x1xf32> to vector<4x8x8xf32>
    %78 = arith.mulf %77, %56 : vector<4x8x8xf32>
    %79 = arith.truncf %72 : vector<4x8x8xf32> to vector<4x8x8xbf16>
    "tpu.trace_start"() <{level = 10 : i32, message = "hqk,hkd->hqd"}> : () -> ()
    %cst_39 = arith.constant dense<0.000000e+00> : vector<4x8x8xf32>
    %80 = tpu.matmul %79, %41, %cst_39 {dimension_numbers = #tpu.dot_dimension_numbers<[2], [1], [1], [2], [0, 0, 0, 1, 1, 2], [0], [0]>} : vector<4x8x8xbf16>, vector<4x8x8xbf16>, vector<4x8x8xf32> -> vector<4x8x8xf32>
    "tpu.trace_stop"() : () -> ()
    %81 = arith.addf %78, %80 : vector<4x8x8xf32>
    %82 = tpu.reciprocal %76 {approx = true} : vector<4x8x1xf32> -> vector<4x8x1xf32>
    %83 = vector.broadcast %82 : vector<4x8x1xf32> to vector<4x8x8xf32>
    %84 = arith.mulf %81, %83 : vector<4x8x8xf32>
    %85 = arith.truncf %84 : vector<4x8x8xf32> to vector<4x8x8xbf16>
    %c0_40 = arith.constant 0 : index
    %c0_41 = arith.constant 0 : index
    %c0_42 = arith.constant 0 : index
    %86 = vector.load %arg10[%c0_40, %c0_41, %c0_42] : memref<4x8x32xbf16, #tpu.memory_space<vmem>>, vector<4x8x32xbf16>
    "tpu.trace_start"() <{level = 10 : i32, message = "hqd,hdE->hqE"}> : () -> ()
    %cst_43 = arith.constant dense<0.000000e+00> : vector<4x8x32xf32>
    %87 = tpu.matmul %85, %86, %cst_43 {dimension_numbers = #tpu.dot_dimension_numbers<[2], [1], [1], [2], [0, 0, 0, 1, 1, 2], [0], [0]>} : vector<4x8x8xbf16>, vector<4x8x32xbf16>, vector<4x8x32xf32> -> vector<4x8x32xf32>
    "tpu.trace_stop"() : () -> ()
    %88 = vector.extract_strided_slice %87 {offsets = [0, 0, 0], sizes = [1, 8, 32], strides = [1, 1, 1]} : vector<4x8x32xf32> to vector<1x8x32xf32>
    %89 = vector.shape_cast %88 : vector<1x8x32xf32> to vector<8x32xf32>
    %90 = vector.extract_strided_slice %87 {offsets = [1, 0, 0], sizes = [1, 8, 32], strides = [1, 1, 1]} : vector<4x8x32xf32> to vector<1x8x32xf32>
    %91 = vector.shape_cast %90 : vector<1x8x32xf32> to vector<8x32xf32>
    %92 = arith.addf %89, %91 : vector<8x32xf32>
    %93 = vector.extract_strided_slice %87 {offsets = [2, 0, 0], sizes = [1, 8, 32], strides = [1, 1, 1]} : vector<4x8x32xf32> to vector<1x8x32xf32>
    %94 = vector.shape_cast %93 : vector<1x8x32xf32> to vector<8x32xf32>
    %95 = arith.addf %92, %94 : vector<8x32xf32>
    %96 = vector.extract_strided_slice %87 {offsets = [3, 0, 0], sizes = [1, 8, 32], strides = [1, 1, 1]} : vector<4x8x32xf32> to vector<1x8x32xf32>
    %97 = vector.shape_cast %96 : vector<1x8x32xf32> to vector<8x32xf32>
    %98 = arith.addf %95, %97 : vector<8x32xf32>
    %c0_44 = arith.constant 0 : index
    %c0_45 = arith.constant 0 : index
    %99 = vector.load %arg11[%c0_44, %c0_45] : memref<1x32xf32, #tpu.memory_space<vmem>>, vector<1x32xf32>
    %100 = vector.broadcast %99 : vector<1x32xf32> to vector<8x32xf32>
    %101 = arith.addf %98, %100 : vector<8x32xf32>
    %102 = arith.addf %3, %101 : vector<8x32xf32>
    %c0_46 = arith.constant 0 : index
    %c0_47 = arith.constant 0 : index
    %103 = vector.load %arg18[%c0_46, %c0_47] : memref<1x32xf32, #tpu.memory_space<vmem>>, vector<1x32xf32>
    %c0_48 = arith.constant 0 : index
    %c0_49 = arith.constant 0 : index
    %104 = vector.load %arg19[%c0_48, %c0_49] : memref<1x32xf32, #tpu.memory_space<vmem>>, vector<1x32xf32>
    %cst_50 = arith.constant dense<0.000000e+00> : vector<8xf32>
    %105 = vector.multi_reduction <add>, %102, %cst_50 [1] : vector<8x32xf32> to vector<8xf32>
    %106 = vector.shape_cast %105 : vector<8xf32> to vector<8x1xf32>
    %cst_51 = arith.constant 3.200000e+01 : f32
    %107 = vector.broadcast %cst_51 : f32 to vector<8x1xf32>
    %108 = arith.divf %106, %107 : vector<8x1xf32>
    %109 = vector.broadcast %108 : vector<8x1xf32> to vector<8x32xf32>
    %110 = arith.subf %102, %109 : vector<8x32xf32>
    %111 = arith.mulf %110, %110 : vector<8x32xf32>
    %cst_52 = arith.constant dense<0.000000e+00> : vector<8xf32>
    %112 = vector.multi_reduction <add>, %111, %cst_52 [1] : vector<8x32xf32> to vector<8xf32>
    %113 = vector.shape_cast %112 : vector<8xf32> to vector<8x1xf32>
    %cst_53 = arith.constant 0.0322580636 : f32
    %114 = vector.broadcast %cst_53 : f32 to vector<8x1xf32>
    %115 = arith.mulf %113, %114 : vector<8x1xf32>
    %116 = math.sqrt %115 : vector<8x1xf32>
    %cst_54 = arith.constant 9.99999997E-7 : f32
    %117 = vector.broadcast %cst_54 : f32 to vector<8x1xf32>
    %118 = arith.addf %116, %117 : vector<8x1xf32>
    %119 = vector.broadcast %118 : vector<8x1xf32> to vector<8x32xf32>
    %120 = arith.divf %110, %119 : vector<8x32xf32>
    %121 = vector.broadcast %103 : vector<1x32xf32> to vector<8x32xf32>
    %122 = arith.mulf %121, %120 : vector<8x32xf32>
    %123 = vector.broadcast %104 : vector<1x32xf32> to vector<8x32xf32>
    %124 = arith.addf %122, %123 : vector<8x32xf32>
    %125 = arith.truncf %124 : vector<8x32xf32> to vector<8x32xbf16>
    %c0_55 = arith.constant 0 : index
    %c0_56 = arith.constant 0 : index
    %126 = vector.load %arg12[%c0_55, %c0_56] : memref<32x128xbf16, #tpu.memory_space<vmem>>, vector<32x128xbf16>
    %cst_57 = arith.constant dense<0.000000e+00> : vector<8x128xf32>
    %127 = tpu.matmul %125, %126, %cst_57 {dimension_numbers = #tpu.dot_dimension_numbers<[1], [0], [0], [1], [0, 0, 1, 1], [], []>} : vector<8x32xbf16>, vector<32x128xbf16>, vector<8x128xf32> -> vector<8x128xf32>
    %c0_58 = arith.constant 0 : index
    %c0_59 = arith.constant 0 : index
    %128 = vector.load %arg13[%c0_58, %c0_59] : memref<1x128xf32, #tpu.memory_space<vmem>>, vector<1x128xf32>
    %129 = vector.broadcast %128 : vector<1x128xf32> to vector<8x128xf32>
    %130 = arith.addf %127, %129 : vector<8x128xf32>
    %cst_60 = arith.constant 5.000000e-01 : f32
    %131 = vector.broadcast %cst_60 : f32 to vector<8x128xf32>
    %132 = arith.mulf %131, %130 : vector<8x128xf32>
    %cst_61 = arith.constant 4.471500e-02 : f32
    %133 = vector.broadcast %cst_61 : f32 to vector<8x128xf32>
    %134 = arith.mulf %133, %130 : vector<8x128xf32>
    %135 = arith.mulf %134, %130 : vector<8x128xf32>
    %136 = arith.mulf %135, %130 : vector<8x128xf32>
    %137 = arith.addf %130, %136 : vector<8x128xf32>
    %cst_62 = arith.constant 0.797884583 : f32
    %138 = vector.broadcast %cst_62 : f32 to vector<8x128xf32>
    %139 = arith.mulf %138, %137 : vector<8x128xf32>
    %140 = math.tanh %139 : vector<8x128xf32>
    %cst_63 = arith.constant 1.000000e+00 : f32
    %141 = vector.broadcast %cst_63 : f32 to vector<8x128xf32>
    %142 = arith.addf %141, %140 : vector<8x128xf32>
    %143 = arith.mulf %132, %142 : vector<8x128xf32>
    %144 = arith.truncf %143 : vector<8x128xf32> to vector<8x128xbf16>
    %c0_64 = arith.constant 0 : index
    %c0_65 = arith.constant 0 : index
    %145 = vector.load %arg14[%c0_64, %c0_65] : memref<128x32xbf16, #tpu.memory_space<vmem>>, vector<128x32xbf16>
    %cst_66 = arith.constant dense<0.000000e+00> : vector<8x32xf32>
    %146 = tpu.matmul %144, %145, %cst_66 {dimension_numbers = #tpu.dot_dimension_numbers<[1], [0], [0], [1], [0, 0, 1, 1], [], []>} : vector<8x128xbf16>, vector<128x32xbf16>, vector<8x32xf32> -> vector<8x32xf32>
    %c0_67 = arith.constant 0 : index
    %c0_68 = arith.constant 0 : index
    %147 = vector.load %arg15[%c0_67, %c0_68] : memref<1x32xf32, #tpu.memory_space<vmem>>, vector<1x32xf32>
    %148 = vector.broadcast %147 : vector<1x32xf32> to vector<8x32xf32>
    %149 = arith.addf %146, %148 : vector<8x32xf32>
    %150 = arith.addf %102, %149 : vector<8x32xf32>
    %c0_69 = arith.constant 0 : index
    %c0_70 = arith.constant 0 : index
    %c0_71 = arith.constant 0 : index
    %151 = vector.load %arg20[%c0_69, %c0_70, %c0_71] : memref<1x8x32xf32, #tpu.memory_space<vmem>>, vector<1x8x32xf32>
    %152 = vector.shape_cast %151 : vector<1x8x32xf32> to vector<8x32xf32>
    %153 = vector.shape_cast %150 : vector<8x32xf32> to vector<1x8x32xf32>
    tpu.vector_store %arg20[%c0_69, %c0_70, %c0_71], %153 {strides = array<i32>} : memref<1x8x32xf32, #tpu.memory_space<vmem>>, vector<1x8x32xf32>,
    return
  }
  func.func @transform_0(%arg0: i32, %arg1: i32, %arg2: memref<2xi32, #tpu.memory_space<smem>>) -> (i32, i32, i32) {
    %c0_i32 = arith.constant 0 : i32
    %c0_i32_0 = arith.constant 0 : i32
    %c0_i32_1 = arith.constant 0 : i32
    return %arg0, %c0_i32, %c0_i32_0 : i32, i32, i32
  }
  func.func @transform_1(%arg0: i32, %arg1: i32, %arg2: memref<2xi32, #tpu.memory_space<smem>>) -> (i32, i32, i32) {
    %c0_i32 = arith.constant 0 : i32
    %c0_i32_0 = arith.constant 0 : i32
    %c0_i32_1 = arith.constant 0 : i32
    %c0_i32_2 = arith.constant 0 : i32
    return %c0_i32, %c0_i32_0, %c0_i32_1 : i32, i32, i32
  }
  func.func @transform_2(%arg0: i32, %arg1: i32, %arg2: memref<2xi32, #tpu.memory_space<smem>>) -> (i32, i32, i32) {
    %c0_i32 = arith.constant 0 : i32
    %c0_i32_0 = arith.constant 0 : i32
    %c0_i32_1 = arith.constant 0 : i32
    %c0_i32_2 = arith.constant 0 : i32
    return %c0_i32, %c0_i32_0, %c0_i32_1 : i32, i32, i32
  }
  func.func @transform_3(%arg0: i32, %arg1: i32, %arg2: memref<2xi32, #tpu.memory_space<smem>>) -> (i32, i32, i32) {
    %c0_i32 = arith.constant 0 : i32
    %c0_i32_0 = arith.constant 0 : i32
    %c0_i32_1 = arith.constant 0 : i32
    %c0_i32_2 = arith.constant 0 : i32
    return %c0_i32, %c0_i32_0, %c0_i32_1 : i32, i32, i32
  }
  func.func @transform_4(%arg0: i32, %arg1: i32, %arg2: memref<2xi32, #tpu.memory_space<smem>>) -> (i32, i32, i32) {
    %c0_i32 = arith.constant 0 : i32
    %c0_i32_0 = arith.constant 0 : i32
    %c0_i32_1 = arith.constant 0 : i32
    %c0_i32_2 = arith.constant 0 : i32
    return %c0_i32, %c0_i32_0, %c0_i32_1 : i32, i32, i32
  }
  func.func @transform_5(%arg0: i32, %arg1: i32, %arg2: memref<2xi32, #tpu.memory_space<smem>>) -> (i32, i32, i32) {
    %c0_i32 = arith.constant 0 : i32
    %c0_i32_0 = arith.constant 0 : i32
    %c0_i32_1 = arith.constant 0 : i32
    %c0_i32_2 = arith.constant 0 : i32
    return %c0_i32, %c0_i32_0, %c0_i32_1 : i32, i32, i32
  }
  func.func @transform_6(%arg0: i32, %arg1: i32, %arg2: memref<2xi32, #tpu.memory_space<smem>>) -> (i32, i32, i32) {
    %c0_i32 = arith.constant 0 : i32
    %c0_i32_0 = arith.constant 0 : i32
    %c0_i32_1 = arith.constant 0 : i32
    %c0_i32_2 = arith.constant 0 : i32
    return %c0_i32, %c0_i32_0, %c0_i32_1 : i32, i32, i32
  }
  func.func @transform_7(%arg0: i32, %arg1: i32, %arg2: memref<2xi32, #tpu.memory_space<smem>>) -> (i32, i32, i32) {
    %c0_i32 = arith.constant 0 : i32
    %c0_i32_0 = arith.constant 0 : i32
    %c0_i32_1 = arith.constant 0 : i32
    %c0_i32_2 = arith.constant 0 : i32
    return %c0_i32, %c0_i32_0, %c0_i32_1 : i32, i32, i32
  }
  func.func @transform_8(%arg0: i32, %arg1: i32, %arg2: memref<2xi32, #tpu.memory_space<smem>>) -> (i32, i32) {
    %c0_i32 = arith.constant 0 : i32
    %c0_i32_0 = arith.constant 0 : i32
    %c0_i32_1 = arith.constant 0 : i32
    return %c0_i32, %c0_i32_0 : i32, i32
  }
  func.func @transform_9(%arg0: i32, %arg1: i32, %arg2: memref<2xi32, #tpu.memory_space<smem>>) -> (i32, i32) {
    %c0_i32 = arith.constant 0 : i32
    %c0_i32_0 = arith.constant 0 : i32
    %c0_i32_1 = arith.constant 0 : i32
    return %c0_i32, %c0_i32_0 : i32, i32
  }
  func.func @transform_10(%arg0: i32, %arg1: i32, %arg2: memref<2xi32, #tpu.memory_space<smem>>) -> (i32, i32) {
    %c0_i32 = arith.constant 0 : i32
    %c0_i32_0 = arith.constant 0 : i32
    %c0_i32_1 = arith.constant 0 : i32
    return %c0_i32, %c0_i32_0 : i32, i32
  }
  func.func @transform_11(%arg0: i32, %arg1: i32, %arg2: memref<2xi32, #tpu.memory_space<smem>>) -> (i32, i32) {
    %c0_i32 = arith.constant 0 : i32
    %c0_i32_0 = arith.constant 0 : i32
    %c0_i32_1 = arith.constant 0 : i32
    return %c0_i32, %c0_i32_0 : i32, i32
  }
  func.func @transform_12(%arg0: i32, %arg1: i32, %arg2: memref<2xi32, #tpu.memory_space<smem>>) -> (i32, i32) {
    %c0_i32 = arith.constant 0 : i32
    %c0_i32_0 = arith.constant 0 : i32
    %c0_i32_1 = arith.constant 0 : i32
    return %c0_i32, %c0_i32_0 : i32, i32
  }
  func.func @transform_13(%arg0: i32, %arg1: i32, %arg2: memref<2xi32, #tpu.memory_space<smem>>) -> (i32, i32) {
    %c0_i32 = arith.constant 0 : i32
    %c0_i32_0 = arith.constant 0 : i32
    %c0_i32_1 = arith.constant 0 : i32
    return %c0_i32, %c0_i32_0 : i32, i32
  }
  func.func @transform_14(%arg0: i32, %arg1: i32, %arg2: memref<2xi32, #tpu.memory_space<smem>>) -> (i32, i32) {
    %c0_i32 = arith.constant 0 : i32
    %c0_i32_0 = arith.constant 0 : i32
    %c0_i32_1 = arith.constant 0 : i32
    return %c0_i32, %c0_i32_0 : i32, i32
  }
  func.func @transform_15(%arg0: i32, %arg1: i32, %arg2: memref<2xi32, #tpu.memory_space<smem>>) -> (i32, i32) {
    %c0_i32 = arith.constant 0 : i32
    %c0_i32_0 = arith.constant 0 : i32
    %c0_i32_1 = arith.constant 0 : i32
    return %c0_i32, %c0_i32_0 : i32, i32
  }
  func.func @transform_16(%arg0: i32, %arg1: i32, %arg2: memref<2xi32, #tpu.memory_space<smem>>) -> (i32, i32) {
    %c0_i32 = arith.constant 0 : i32
    %c0_i32_0 = arith.constant 0 : i32
    %c0_i32_1 = arith.constant 0 : i32
    return %c0_i32, %c0_i32_0 : i32, i32
  }
  func.func @transform_17(%arg0: i32, %arg1: i32, %arg2: memref<2xi32, #tpu.memory_space<smem>>) -> (i32, i32, i32) {
    %c0_i32 = arith.constant 0 : i32
    %c0_i32_0 = arith.constant 0 : i32
    return %arg0, %arg1, %c0_i32 : i32, i32, i32
  }
}

</mosaic_0001>

<llo_original>
// kernel: tpu_custom_call.1
$region0: #{tpu_custom_call.1}
  #allocation0 [shape = 'u32[]', space=smem, size = 0x4, offset = 0x4, fixed_abs, tag = 'smem constant byte address 0x4 - core index']
  #allocation1 [shape = 'u32[144,128]{1,0:T(1,128)}', space=vmem, size = 0x12000, scoped, tag = 'internal scratch']
  #allocation2 [shape = 's32[1]{0}', space=sflag, size = 0x4, scoped, tag = 'scoped memory for tpu_custom_call.1']
  #allocation3 [shape = 'u8[512]{0}', space=smem, size = 0x200, scoped, tag = 'prefetched SMEM operand 0']
  %s0 = inlined_call_operand.hbm [shape: s32[2], index: 0, kind: input, shape index: {}]
  %s1 = inlined_call_operand.vmem [shape: f32[2,8,32], index: 1, kind: input, shape index: {}]
  %s2 = inlined_call_operand.vmem [shape: bf16[4,8,32], index: 2, kind: input, shape index: {}]
  %s3 = inlined_call_operand.vmem [shape: f32[4,1,8], index: 3, kind: input, shape index: {}]
  %s4 = inlined_call_operand.vmem [shape: bf16[4,8,32], index: 4, kind: input, shape index: {}]
  %s5 = inlined_call_operand.hbm [shape: f32[4,1,8], index: 5, kind: input, shape index: {}]
  %s6 = inlined_call_operand.vmem [shape: bf16[4,8,32], index: 6, kind: input, shape index: {}]
  %s7 = inlined_call_operand.hbm [shape: f32[4,1,8], index: 7, kind: input, shape index: {}]
  %s8 = inlined_call_operand.vmem [shape: bf16[4,8,32], index: 8, kind: input, shape index: {}]
  %s9 = inlined_call_operand.vmem [shape: f32[1,32], index: 9, kind: input, shape index: {}]
  %s10 = inlined_call_operand.hbm [shape: bf16[32,128], index: 10, kind: input, shape index: {}]
  %s11 = inlined_call_operand.hbm [shape: f32[1,128], index: 11, kind: input, shape index: {}]
  %s12 = inlined_call_operand.vmem [shape: bf16[128,32], index: 12, kind: input, shape index: {}]
  %s13 = inlined_call_operand.vmem [shape: f32[1,32], index: 13, kind: input, shape index: {}]
  %s14 = inlined_call_operand.vmem [shape: f32[1,32], index: 14, kind: input, shape index: {}]
  %s15 = inlined_call_operand.vmem [shape: f32[1,32], index: 15, kind: input, shape index: {}]
  %s16 = inlined_call_operand.vmem [shape: f32[1,32], index: 16, kind: input, shape index: {}]
  %s17 = inlined_call_operand.vmem [shape: f32[1,32], index: 17, kind: input, shape index: {}]
  %s18 = inlined_call_operand.hbm [shape: f32[2,8,32], index: 18, kind: output, shape index: {}]
  %s19 = sld [smem:[#allocation0]]
  $region117: #{tpu_custom_call.1} parent=0
    _
  %s21 = ssub.s32 1, %s19
  %s22 = scalar_select 0, %s21, %s19
  %24 = dma.hbm_to_smem %s0, 16, [#allocation3], [#allocation2]
  %25 = dma.done [#allocation2], 16
  %26 = sfence
  $region1: #{tpu_custom_call.1} parent=0
    #allocation4 [shape = 'u8[2048]{0}', space=vmem, size = 0x800, scoped, tag = 'input window, operand 5, single buffered']
    #allocation5 [shape = 's32[2]{0}', space=sflag, size = 0x8, scoped, tag = 'scoped memory for tpu_custom_call.1']
    #allocation6 [shape = 's32[2]{0}', space=sflag, size = 0x8, scoped, tag = 'scoped memory for tpu_custom_call.1']
    #allocation7 [shape = 'u8[2048]{0}', space=vmem, size = 0x800, scoped, tag = 'input window, operand 7, single buffered']
    #allocation8 [shape = 's32[1]{0}', space=sflag, size = 0x4, scoped, tag = 'scoped memory for tpu_custom_call.1']
    #allocation9 [shape = 'u8[8192]{0}', space=vmem, size = 0x2000, scoped, tag = 'input window, operand 10, single buffered']
    #allocation10 [shape = 'u8[512]{0}', space=vmem, size = 0x400, scoped, tag = 'input window, operand 11, single buffered']
    #allocation11 [shape = 's32[1]{0}', space=sflag, size = 0x4, scoped, tag = 'scoped memory for tpu_custom_call.1']
    #allocation12 [shape = 'u8[8192]{0}', space=vmem, size = 0x2000, scoped, tag = 'output window, operand 0']
    %27 = vsyncpa [#allocation5], 0
    %28 = vsyncpa [#allocation8], 0
    %29 = vsyncpa [#allocation11], 0
    %30 = vsyncpa [#allocation6], 0
    %s31 = scalar_lea.sflag [#allocation6], 1
    %32 = vsyncpa %s31, 0
    loop: start=0, step=1, limit=4
    $region2: #{tpu_custom_call.1} parent=1 // loop_pre_header
      _
    $region3: #{tpu_custom_call.1} parent=1 // loop_header
      %s34 = sphi 0, %s38
      %p35 = scmp.ge.s32.totalorder %s34, 4
      %s41 = sphi 0, %s53
      %s42 = sphi 0, %s49
      %s43 = sphi 0, %s41
      %s44 = sphi 0, %s42
      %s45 = sphi 0, %s43
      %s46 = sphi 0, %s44
      %s56 = sphi 0, %s58
      %s59 = sphi 0, %s56
      %s60 = sphi 0, %s59
      %s76 = sphi 0, %s60
      %s80 = sphi 0, %s80
      %s82 = sphi 0, %s80
      %s83 = sphi 0, %s82
      %s97 = sphi 0, %s83
      %s101 = sphi 0, %s101
      %s103 = sphi 0, %s101
      %s104 = sphi 0, %s103
      %s118 = sphi 0, %s104
      %s122 = sphi 0, %s122
      %s124 = sphi 0, %s122
      %s125 = sphi 0, %s124
      %s139 = sphi 0, %s125
      %s143 = sphi 0, %s143
      %s145 = sphi 0, %s143
      %s146 = sphi 0, %s145
      %s160 = sphi 0, %s146
      %s164 = sphi 0, %s164
      %s166 = sphi 0, %s164
      %s167 = sphi 0, %s166
      %s181 = sphi 0, %s167
      %s185 = sphi 0, %s185
      %s187 = sphi 0, %s185
      %s188 = sphi 0, %s187
      %s202 = sphi 0, %s188
      %s206 = sphi 0, %s206
      %s208 = sphi 0, %s206
      %s209 = sphi 0, %s208
      %s223 = sphi 0, %s209
      %s227 = sphi 0, %s227
      %s229 = sphi 0, %s227
      %s230 = sphi 0, %s229
      %s244 = sphi 0, %s230
      %s248 = sphi 0, %s248
      %s250 = sphi 0, %s248
      %s251 = sphi 0, %s250
      %s265 = sphi 0, %s251
      %s269 = sphi 0, %s269
      %s271 = sphi 0, %s269
      %s272 = sphi 0, %s271
      %s286 = sphi 0, %s272
      %s290 = sphi 0, %s290
      %s292 = sphi 0, %s290
      %s293 = sphi 0, %s292
      %s307 = sphi 0, %s293
      %s311 = sphi 0, %s311
      %s313 = sphi 0, %s311
      %s314 = sphi 0, %s313
      %s328 = sphi 0, %s314
      %s332 = sphi 0, %s332
      %s334 = sphi 0, %s332
      %s335 = sphi 0, %s334
      %s349 = sphi 0, %s335
      %s353 = sphi 0, %s353
      %s355 = sphi 0, %s353
      %s356 = sphi 0, %s355
      %s370 = sphi 0, %s356
      %s374 = sphi 0, %s374
      %s376 = sphi 0, %s374
      %s377 = sphi 0, %s376
      %s391 = sphi 0, %s377
      %s395 = sphi 0, %s395
      %s397 = sphi 0, %s395
      %s398 = sphi 0, %s397
      %s412 = sphi 0, %s398
      %s420 = sphi 0, %s422
      %s423 = sphi 0, %s420
      %s424 = sphi 0, %s423
      %s440 = sphi 0, %s424
    $region4: #{tpu_custom_call.1} parent=1 // loop_header_branch
      %37 = sbr.rel (%p35) target = $region8
    $region5: #{tpu_custom_call.1} parent=1 // loop_body
      %s39 = ssub.s32 %s34, 1
      %s40 = ssub.s32 %s34, 2
      %s47 = sadd.s32 1, %s42
      %p48 = scmp.ge.s32.totalorder %s47, 1
      %s49 = scalar_select %p48, 0, %s47
      %s50 = sadd.s32 1, %s41
      %s51 = scalar_select %p48, %s50, %s41
      %p52 = scmp.ge.s32.totalorder %s51, 2
      %s53 = scalar_select %p52, 0, %s51
      %s54 = ssub.s32 %s41, %s53
      %p55 = scmp.eq.s32.totalorder %s54, 0
      %s57 = sadd.s32 %s56, 1
      %s58 = scalar_select %p55, %s56, %s57
      %p61 = pneg %p55
      %p62 = scmp.eq.s32.totalorder %s34, 1
      %p63 = por %p61, %p62
      %p64 = scmp.ne.s32.totalorder %s56, %s59
      %p65 = scmp.eq.s32.totalorder %s34, 0
      %p66 = por %p64, %p65
      %p67 = scmp.ne.s32.totalorder %s56, %s59
      %p68 = scmp.eq.s32.totalorder %s39, 1
      %p69 = por %p67, %p68
      %p70 = scmp.ne.s32.totalorder %s59, %s60
      %p71 = scmp.eq.s32.totalorder %s39, 0
      %p72 = por %p70, %p71
      %p73 = scmp.ne.s32.totalorder %s59, %s60
      %p74 = scmp.eq.s32.totalorder %s40, 1
      %p75 = por %p73, %p74
      %p77 = scmp.ne.s32.totalorder %s60, %s76
      %p78 = scmp.eq.s32.totalorder %s40, 0
      %p79 = por %p77, %p78
      %s81 = sadd.s32 %s80, 1
      %p84 = scmp.eq.s32.totalorder %s34, 1
      %p85 = scmp.ne.s32.totalorder %s80, %s82
      %p86 = scmp.eq.s32.totalorder %s34, 0
      %p87 = por %p85, %p86
      %p88 = scmp.ne.s32.totalorder %s80, %s82
      %p89 = scmp.eq.s32.totalorder %s39, 1
      %p90 = por %p88, %p89
      %p91 = scmp.ne.s32.totalorder %s82, %s83
      %p92 = scmp.eq.s32.totalorder %s39, 0
      %p93 = por %p91, %p92
      %p94 = scmp.ne.s32.totalorder %s82, %s83
      %p95 = scmp.eq.s32.totalorder %s40, 1
      %p96 = por %p94, %p95
      %p98 = scmp.ne.s32.totalorder %s83, %s97
      %p99 = scmp.eq.s32.totalorder %s40, 0
      %p100 = por %p98, %p99
      %s102 = sadd.s32 %s101, 1
      %p105 = scmp.eq.s32.totalorder %s34, 1
      %p106 = scmp.ne.s32.totalorder %s101, %s103
      %p107 = scmp.eq.s32.totalorder %s34, 0
      %p108 = por %p106, %p107
      %p109 = scmp.ne.s32.totalorder %s101, %s103
      %p110 = scmp.eq.s32.totalorder %s39, 1
      %p111 = por %p109, %p110
      %p112 = scmp.ne.s32.totalorder %s103, %s104
      %p113 = scmp.eq.s32.totalorder %s39, 0
      %p114 = por %p112, %p113
      %p115 = scmp.ne.s32.totalorder %s103, %s104
      %p116 = scmp.eq.s32.totalorder %s40, 1
      %p117 = por %p115, %p116
      %p119 = scmp.ne.s32.totalorder %s104, %s118
      %p120 = scmp.eq.s32.totalorder %s40, 0
      %p121 = por %p119, %p120
      %s123 = sadd.s32 %s122, 1
      %p126 = scmp.eq.s32.totalorder %s34, 1
      %p127 = scmp.ne.s32.totalorder %s122, %s124
      %p128 = scmp.eq.s32.totalorder %s34, 0
      %p129 = por %p127, %p128
      %p130 = scmp.ne.s32.totalorder %s122, %s124
      %p131 = scmp.eq.s32.totalorder %s39, 1
      %p132 = por %p130, %p131
      %p133 = scmp.ne.s32.totalorder %s124, %s125
      %p134 = scmp.eq.s32.totalorder %s39, 0
      %p135 = por %p133, %p134
      %p136 = scmp.ne.s32.totalorder %s124, %s125
      %p137 = scmp.eq.s32.totalorder %s40, 1
      %p138 = por %p136, %p137
      %p140 = scmp.ne.s32.totalorder %s125, %s139
      %p141 = scmp.eq.s32.totalorder %s40, 0
      %p142 = por %p140, %p141
      %s144 = sadd.s32 %s143, 1
      %p147 = scmp.eq.s32.totalorder %s34, 1
      %p148 = scmp.ne.s32.totalorder %s143, %s145
      %p149 = scmp.eq.s32.totalorder %s34, 0
      %p150 = por %p148, %p149
      %p151 = scmp.ne.s32.totalorder %s143, %s145
      %p152 = scmp.eq.s32.totalorder %s39, 1
      %p153 = por %p151, %p152
      %p154 = scmp.ne.s32.totalorder %s145, %s146
      %p155 = scmp.eq.s32.totalorder %s39, 0
      %p156 = por %p154, %p155
      %p157 = scmp.ne.s32.totalorder %s145, %s146
      %p158 = scmp.eq.s32.totalorder %s40, 1
      %p159 = por %p157, %p158
      %p161 = scmp.ne.s32.totalorder %s146, %s160
      %p162 = scmp.eq.s32.totalorder %s40, 0
      %p163 = por %p161, %p162
      %s165 = sadd.s32 %s164, 1
      %p168 = scmp.eq.s32.totalorder %s34, 1
      %p169 = scmp.ne.s32.totalorder %s164, %s166
      %p170 = scmp.eq.s32.totalorder %s34, 0
      %p171 = por %p169, %p170
      %p172 = scmp.ne.s32.totalorder %s164, %s166
      %p173 = scmp.eq.s32.totalorder %s39, 1
      %p174 = por %p172, %p173
      %p175 = scmp.ne.s32.totalorder %s166, %s167
      %p176 = scmp.eq.s32.totalorder %s39, 0
      %p177 = por %p175, %p176
      %p178 = scmp.ne.s32.totalorder %s166, %s167
      %p179 = scmp.eq.s32.totalorder %s40, 1
      %p180 = por %p178, %p179
      %p182 = scmp.ne.s32.totalorder %s167, %s181
      %p183 = scmp.eq.s32.totalorder %s40, 0
      %p184 = por %p182, %p183
      %s186 = sadd.s32 %s185, 1
      %p189 = scmp.eq.s32.totalorder %s34, 1
      %p190 = scmp.ne.s32.totalorder %s185, %s187
      %p191 = scmp.eq.s32.totalorder %s34, 0
      %p192 = por %p190, %p191
      %p193 = scmp.ne.s32.totalorder %s185, %s187
      %p194 = scmp.eq.s32.totalorder %s39, 1
      %p195 = por %p193, %p194
      %p196 = scmp.ne.s32.totalorder %s187, %s188
      %p197 = scmp.eq.s32.totalorder %s39, 0
      %p198 = por %p196, %p197
      %p199 = scmp.ne.s32.totalorder %s187, %s188
      %p200 = scmp.eq.s32.totalorder %s40, 1
      %p201 = por %p199, %p200
      %p203 = scmp.ne.s32.totalorder %s188, %s202
      %p204 = scmp.eq.s32.totalorder %s40, 0
      %p205 = por %p203, %p204
      %s207 = sadd.s32 %s206, 1
      %p210 = scmp.eq.s32.totalorder %s34, 1
      %p211 = scmp.ne.s32.totalorder %s206, %s208
      %p212 = scmp.eq.s32.totalorder %s34, 0
      %p213 = por %p211, %p212
      %p214 = scmp.ne.s32.totalorder %s206, %s208
      %p215 = scmp.eq.s32.totalorder %s39, 1
      %p216 = por %p214, %p215
      %p217 = scmp.ne.s32.totalorder %s208, %s209
      %p218 = scmp.eq.s32.totalorder %s39, 0
      %p219 = por %p217, %p218
      %p220 = scmp.ne.s32.totalorder %s208, %s209
      %p221 = scmp.eq.s32.totalorder %s40, 1
      %p222 = por %p220, %p221
      %p224 = scmp.ne.s32.totalorder %s209, %s223
      %p225 = scmp.eq.s32.totalorder %s40, 0
      %p226 = por %p224, %p225
      %s228 = sadd.s32 %s227, 1
      %p231 = scmp.eq.s32.totalorder %s34, 1
      %p232 = scmp.ne.s32.totalorder %s227, %s229
      %p233 = scmp.eq.s32.totalorder %s34, 0
      %p234 = por %p232, %p233
      %p235 = scmp.ne.s32.totalorder %s227, %s229
      %p236 = scmp.eq.s32.totalorder %s39, 1
      %p237 = por %p235, %p236
      %p238 = scmp.ne.s32.totalorder %s229, %s230
      %p239 = scmp.eq.s32.totalorder %s39, 0
      %p240 = por %p238, %p239
      %p241 = scmp.ne.s32.totalorder %s229, %s230
      %p242 = scmp.eq.s32.totalorder %s40, 1
      %p243 = por %p241, %p242
      %p245 = scmp.ne.s32.totalorder %s230, %s244
      %p246 = scmp.eq.s32.totalorder %s40, 0
      %p247 = por %p245, %p246
      %s249 = sadd.s32 %s248, 1
      %p252 = scmp.eq.s32.totalorder %s34, 1
      %p253 = scmp.ne.s32.totalorder %s248, %s250
      %p254 = scmp.eq.s32.totalorder %s34, 0
      %p255 = por %p253, %p254
      %p256 = scmp.ne.s32.totalorder %s248, %s250
      %p257 = scmp.eq.s32.totalorder %s39, 1
      %p258 = por %p256, %p257
      %p259 = scmp.ne.s32.totalorder %s250, %s251
      %p260 = scmp.eq.s32.totalorder %s39, 0
      %p261 = por %p259, %p260
      %p262 = scmp.ne.s32.totalorder %s250, %s251
      %p263 = scmp.eq.s32.totalorder %s40, 1
      %p264 = por %p262, %p263
      %p266 = scmp.ne.s32.totalorder %s251, %s265
      %p267 = scmp.eq.s32.totalorder %s40, 0
      %p268 = por %p266, %p267
      %s270 = sadd.s32 %s269, 1
      %p273 = scmp.eq.s32.totalorder %s34, 1
      %p274 = scmp.ne.s32.totalorder %s269, %s271
      %p275 = scmp.eq.s32.totalorder %s34, 0
      %p276 = por %p274, %p275
      %p277 = scmp.ne.s32.totalorder %s269, %s271
      %p278 = scmp.eq.s32.totalorder %s39, 1
      %p279 = por %p277, %p278
      %p280 = scmp.ne.s32.totalorder %s271, %s272
      %p281 = scmp.eq.s32.totalorder %s39, 0
      %p282 = por %p280, %p281
      %p283 = scmp.ne.s32.totalorder %s271, %s272
      %p284 = scmp.eq.s32.totalorder %s40, 1
      %p285 = por %p283, %p284
      %p287 = scmp.ne.s32.totalorder %s272, %s286
      %p288 = scmp.eq.s32.totalorder %s40, 0
      %p289 = por %p287, %p288
      %s291 = sadd.s32 %s290, 1
      %p294 = scmp.eq.s32.totalorder %s34, 1
      %p295 = scmp.ne.s32.totalorder %s290, %s292
      %p296 = scmp.eq.s32.totalorder %s34, 0
      %p297 = por %p295, %p296
      %p298 = scmp.ne.s32.totalorder %s290, %s292
      %p299 = scmp.eq.s32.totalorder %s39, 1
      %p300 = por %p298, %p299
      %p301 = scmp.ne.s32.totalorder %s292, %s293
      %p302 = scmp.eq.s32.totalorder %s39, 0
      %p303 = por %p301, %p302
      %p304 = scmp.ne.s32.totalorder %s292, %s293
      %p305 = scmp.eq.s32.totalorder %s40, 1
      %p306 = por %p304, %p305
      %p308 = scmp.ne.s32.totalorder %s293, %s307
      %p309 = scmp.eq.s32.totalorder %s40, 0
      %p310 = por %p308, %p309
      %s312 = sadd.s32 %s311, 1
      %p315 = scmp.eq.s32.totalorder %s34, 1
      %p316 = scmp.ne.s32.totalorder %s311, %s313
      %p317 = scmp.eq.s32.totalorder %s34, 0
      %p318 = por %p316, %p317
      %p319 = scmp.ne.s32.totalorder %s311, %s313
      %p320 = scmp.eq.s32.totalorder %s39, 1
      %p321 = por %p319, %p320
      %p322 = scmp.ne.s32.totalorder %s313, %s314
      %p323 = scmp.eq.s32.totalorder %s39, 0
      %p324 = por %p322, %p323
      %p325 = scmp.ne.s32.totalorder %s313, %s314
      %p326 = scmp.eq.s32.totalorder %s40, 1
      %p327 = por %p325, %p326
      %p329 = scmp.ne.s32.totalorder %s314, %s328
      %p330 = scmp.eq.s32.totalorder %s40, 0
      %p331 = por %p329, %p330
      %s333 = sadd.s32 %s332, 1
      %p336 = scmp.eq.s32.totalorder %s34, 1
      %p337 = scmp.ne.s32.totalorder %s332, %s334
      %p338 = scmp.eq.s32.totalorder %s34, 0
      %p339 = por %p337, %p338
      %p340 = scmp.ne.s32.totalorder %s332, %s334
      %p341 = scmp.eq.s32.totalorder %s39, 1
      %p342 = por %p340, %p341
      %p343 = scmp.ne.s32.totalorder %s334, %s335
      %p344 = scmp.eq.s32.totalorder %s39, 0
      %p345 = por %p343, %p344
      %p346 = scmp.ne.s32.totalorder %s334, %s335
      %p347 = scmp.eq.s32.totalorder %s40, 1
      %p348 = por %p346, %p347
      %p350 = scmp.ne.s32.totalorder %s335, %s349
      %p351 = scmp.eq.s32.totalorder %s40, 0
      %p352 = por %p350, %p351
      %s354 = sadd.s32 %s353, 1
      %p357 = scmp.eq.s32.totalorder %s34, 1
      %p358 = scmp.ne.s32.totalorder %s353, %s355
      %p359 = scmp.eq.s32.totalorder %s34, 0
      %p360 = por %p358, %p359
      %p361 = scmp.ne.s32.totalorder %s353, %s355
      %p362 = scmp.eq.s32.totalorder %s39, 1
      %p363 = por %p361, %p362
      %p364 = scmp.ne.s32.totalorder %s355, %s356
      %p365 = scmp.eq.s32.totalorder %s39, 0
      %p366 = por %p364, %p365
      %p367 = scmp.ne.s32.totalorder %s355, %s356
      %p368 = scmp.eq.s32.totalorder %s40, 1
      %p369 = por %p367, %p368
      %p371 = scmp.ne.s32.totalorder %s356, %s370
      %p372 = scmp.eq.s32.totalorder %s40, 0
      %p373 = por %p371, %p372
      %s375 = sadd.s32 %s374, 1
      %p378 = scmp.eq.s32.totalorder %s34, 1
      %p379 = scmp.ne.s32.totalorder %s374, %s376
      %p380 = scmp.eq.s32.totalorder %s34, 0
      %p381 = por %p379, %p380
      %p382 = scmp.ne.s32.totalorder %s374, %s376
      %p383 = scmp.eq.s32.totalorder %s39, 1
      %p384 = por %p382, %p383
      %p385 = scmp.ne.s32.totalorder %s376, %s377
      %p386 = scmp.eq.s32.totalorder %s39, 0
      %p387 = por %p385, %p386
      %p388 = scmp.ne.s32.totalorder %s376, %s377
      %p389 = scmp.eq.s32.totalorder %s40, 1
      %p390 = por %p388, %p389
      %p392 = scmp.ne.s32.totalorder %s377, %s391
      %p393 = scmp.eq.s32.totalorder %s40, 0
      %p394 = por %p392, %p393
      %s396 = sadd.s32 %s395, 1
      %p399 = scmp.eq.s32.totalorder %s34, 1
      %p400 = scmp.ne.s32.totalorder %s395, %s397
      %p401 = scmp.eq.s32.totalorder %s34, 0
      %p402 = por %p400, %p401
      %p403 = scmp.ne.s32.totalorder %s395, %s397
      %p404 = scmp.eq.s32.totalorder %s39, 1
      %p405 = por %p403, %p404
      %p406 = scmp.ne.s32.totalorder %s397, %s398
      %p407 = scmp.eq.s32.totalorder %s39, 0
      %p408 = por %p406, %p407
      %p409 = scmp.ne.s32.totalorder %s397, %s398
      %p410 = scmp.eq.s32.totalorder %s40, 1
      %p411 = por %p409, %p410
      %p413 = scmp.ne.s32.totalorder %s398, %s412
      %p414 = scmp.eq.s32.totalorder %s40, 0
      %p415 = por %p413, %p414
      %s416 = ssub.s32 %s41, %s53
      %s417 = ssub.s32 %s42, %s49
      %s418 = sor.u32 %s416, %s417
      %p419 = scmp.eq.s32.totalorder %s418, 0
      %s421 = sadd.s32 %s420, 1
      %s422 = scalar_select %p419, %s420, %s421
      %p425 = pneg %p419
      %p426 = scmp.eq.s32.totalorder %s34, 1
      %p427 = por %p425, %p426
      %p428 = scmp.ne.s32.totalorder %s420, %s423
      %p429 = scmp.eq.s32.totalorder %s34, 0
      %p430 = por %p428, %p429
      %p431 = scmp.ne.s32.totalorder %s420, %s423
      %p432 = scmp.eq.s32.totalorder %s39, 1
      %p433 = por %p431, %p432
      %p434 = scmp.ne.s32.totalorder %s423, %s424
      %p435 = scmp.eq.s32.totalorder %s39, 0
      %p436 = por %p434, %p435
      %p437 = scmp.ne.s32.totalorder %s423, %s424
      %p438 = scmp.eq.s32.totalorder %s40, 1
      %p439 = por %p437, %p438
      %p441 = scmp.ne.s32.totalorder %s424, %s440
      %p442 = scmp.eq.s32.totalorder %s40, 0
      %p443 = por %p441, %p442
      %p444 = scmp.le.s32.totalorder 1, %s34
      %p445 = scmp.lt.s32.totalorder %s34, 3
      %p446 = pnand %p444, %p445
      %p447 = pneg %p446
      // Predicated region
      $region9: #{tpu_custom_call.1} parent=5 // pred_check
        _
      $region10: #{tpu_custom_call.1} parent=5 // pred_check_branch
        %449 = sbr.rel (%p446) target = $region12
      $region11: #{tpu_custom_call.1} parent=5 // pred_region
        %s450 = ssub.s32 %s34, 1
        // Predicated region
        $region13: #{tpu_custom_call.1} parent=11 // pred_check
          %p451 = pneg %p93
        $region14: #{tpu_custom_call.1} parent=11 // pred_check_branch
          %453 = sbr.rel (%p451) target = $region16
        $region15: #{tpu_custom_call.1} parent=11 // pred_region
          _
        $region16: #{tpu_custom_call.1} parent=11 // pred_fallthru
          _
        // Predicated region
        $region17: #{tpu_custom_call.1} parent=11 // pred_check
          %p454 = pneg %p114
        $region18: #{tpu_custom_call.1} parent=11 // pred_check_branch
          %456 = sbr.rel (%p454) target = $region20
        $region19: #{tpu_custom_call.1} parent=11 // pred_region
          _
        $region20: #{tpu_custom_call.1} parent=11 // pred_fallthru
          _
        // Predicated region
        $region21: #{tpu_custom_call.1} parent=11 // pred_check
          %p457 = pneg %p135
        $region22: #{tpu_custom_call.1} parent=11 // pred_check_branch
          %459 = sbr.rel (%p457) target = $region24
        $region23: #{tpu_custom_call.1} parent=11 // pred_region
          _
        $region24: #{tpu_custom_call.1} parent=11 // pred_fallthru
          _
        // Predicated region
        $region25: #{tpu_custom_call.1} parent=11 // pred_check
          %p460 = pneg %p156
        $region26: #{tpu_custom_call.1} parent=11 // pred_check_branch
          %462 = sbr.rel (%p460) target = $region28
        $region27: #{tpu_custom_call.1} parent=11 // pred_region
          %s464 = ssub.s32 64, 64
          %465 = vsyncadd [#allocation5], %s464
          %s466 = sshll.u32 [#allocation4], 4
          %s467 = int_to_ptr.vmem [resolvable:$true] %s466
          %472 = dma.hbm_to_vmem [thread:$0]  %s5, 64, %s467, [#allocation5], 16, 16, 1
        $region28: #{tpu_custom_call.1} parent=11 // pred_fallthru
          _
        // Predicated region
        $region29: #{tpu_custom_call.1} parent=11 // pred_check
          %p473 = pneg %p177
        $region30: #{tpu_custom_call.1} parent=11 // pred_check_branch
          %475 = sbr.rel (%p473) target = $region32
        $region31: #{tpu_custom_call.1} parent=11 // pred_region
          _
        $region32: #{tpu_custom_call.1} parent=11 // pred_fallthru
          _
        // Predicated region
        $region33: #{tpu_custom_call.1} parent=11 // pred_check
          %p476 = pneg %p198
        $region34: #{tpu_custom_call.1} parent=11 // pred_check_branch
          %478 = sbr.rel (%p476) target = $region36
        $region35: #{tpu_custom_call.1} parent=11 // pred_region
          %s480 = ssub.s32 64, 64
          %481 = vsyncadd [#allocation8], %s480
          %s482 = sshll.u32 [#allocation7], 4
          %s483 = int_to_ptr.vmem [resolvable:$true] %s482
          %488 = dma.hbm_to_vmem [thread:$0]  %s7, 64, %s483, [#allocation8], 16, 16, 1
        $region36: #{tpu_custom_call.1} parent=11 // pred_fallthru
          _
        // Predicated region
        $region37: #{tpu_custom_call.1} parent=11 // pred_check
          %p489 = pneg %p219
        $region38: #{tpu_custom_call.1} parent=11 // pred_check_branch
          %491 = sbr.rel (%p489) target = $region40
        $region39: #{tpu_custom_call.1} parent=11 // pred_region
          _
        $region40: #{tpu_custom_call.1} parent=11 // pred_fallthru
          _
        // Predicated region
        $region41: #{tpu_custom_call.1} parent=11 // pred_check
          %p492 = pneg %p240
        $region42: #{tpu_custom_call.1} parent=11 // pred_check_branch
          %494 = sbr.rel (%p492) target = $region44
        $region43: #{tpu_custom_call.1} parent=11 // pred_region
          _
        $region44: #{tpu_custom_call.1} parent=11 // pred_fallthru
          _
        // Predicated region
        $region45: #{tpu_custom_call.1} parent=11 // pred_check
          %p495 = pneg %p261
        $region46: #{tpu_custom_call.1} parent=11 // pred_check_branch
          %497 = sbr.rel (%p495) target = $region48
        $region47: #{tpu_custom_call.1} parent=11 // pred_region
          %s499 = ssub.s32 256, 256
          %500 = vsyncadd [#allocation8], %s499
          %s501 = sshll.u32 [#allocation9], 4
          %s502 = int_to_ptr.vmem [resolvable:$true] %s501
          %507 = dma.hbm_to_vmem [thread:$0]  %s10, 256, %s502, [#allocation8], 64, 64, 4
        $region48: #{tpu_custom_call.1} parent=11 // pred_fallthru
          _
        // Predicated region
        $region49: #{tpu_custom_call.1} parent=11 // pred_check
          %p508 = pneg %p282
        $region50: #{tpu_custom_call.1} parent=11 // pred_check_branch
          %510 = sbr.rel (%p508) target = $region52
        $region51: #{tpu_custom_call.1} parent=11 // pred_region
          %s512 = ssub.s32 16, 16
          %513 = vsyncadd [#allocation11], %s512
          %s515 = sshll.u32 [#allocation10], 4
          %s516 = int_to_ptr.vmem [resolvable:$true] %s515
          %518 = dma.hbm_to_vmem [thread:$0]  %s11, 16, %s516, [#allocation11]
        $region52: #{tpu_custom_call.1} parent=11 // pred_fallthru
          _
        // Predicated region
        $region53: #{tpu_custom_call.1} parent=11 // pred_check
          %p519 = pneg %p303
        $region54: #{tpu_custom_call.1} parent=11 // pred_check_branch
          %521 = sbr.rel (%p519) target = $region56
        $region55: #{tpu_custom_call.1} parent=11 // pred_region
          _
        $region56: #{tpu_custom_call.1} parent=11 // pred_fallthru
          _
        // Predicated region
        $region57: #{tpu_custom_call.1} parent=11 // pred_check
          %p522 = pneg %p324
        $region58: #{tpu_custom_call.1} parent=11 // pred_check_branch
          %524 = sbr.rel (%p522) target = $region60
        $region59: #{tpu_custom_call.1} parent=11 // pred_region
          _
        $region60: #{tpu_custom_call.1} parent=11 // pred_fallthru
          _
        // Predicated region
        $region61: #{tpu_custom_call.1} parent=11 // pred_check
          %p525 = pneg %p345
        $region62: #{tpu_custom_call.1} parent=11 // pred_check_branch
          %527 = sbr.rel (%p525) target = $region64
        $region63: #{tpu_custom_call.1} parent=11 // pred_region
          _
        $region64: #{tpu_custom_call.1} parent=11 // pred_fallthru
          _
        // Predicated region
        $region65: #{tpu_custom_call.1} parent=11 // pred_check
          %p528 = pneg %p366
        $region66: #{tpu_custom_call.1} parent=11 // pred_check_branch
          %530 = sbr.rel (%p528) target = $region68
        $region67: #{tpu_custom_call.1} parent=11 // pred_region
          _
        $region68: #{tpu_custom_call.1} parent=11 // pred_fallthru
          _
        // Predicated region
        $region69: #{tpu_custom_call.1} parent=11 // pred_check
          %p531 = pneg %p387
        $region70: #{tpu_custom_call.1} parent=11 // pred_check_branch
          %533 = sbr.rel (%p531) target = $region72
        $region71: #{tpu_custom_call.1} parent=11 // pred_region
          _
        $region72: #{tpu_custom_call.1} parent=11 // pred_fallthru
          _
        // Predicated region
        $region73: #{tpu_custom_call.1} parent=11 // pred_check
          %p534 = pneg %p408
        $region74: #{tpu_custom_call.1} parent=11 // pred_check_branch
          %536 = sbr.rel (%p534) target = $region76
        $region75: #{tpu_custom_call.1} parent=11 // pred_region
          _
        $region76: #{tpu_custom_call.1} parent=11 // pred_fallthru
          _
      $region12: #{tpu_custom_call.1} parent=5 // pred_fallthru
        _
      %p537 = scmp.lt.s32.totalorder %s34, 2
      // Predicated region
      $region77: #{tpu_custom_call.1} parent=5 // pred_check
        %p538 = pneg %p537
      $region78: #{tpu_custom_call.1} parent=5 // pred_check_branch
        %540 = sbr.rel (%p538) target = $region80
      $region79: #{tpu_custom_call.1} parent=5 // pred_region
        // Predicated region
        $region81: #{tpu_custom_call.1} parent=79 // pred_check
          %p541 = pneg %p66
        $region82: #{tpu_custom_call.1} parent=79 // pred_check_branch
          %543 = sbr.rel (%p541) target = $region84
        $region83: #{tpu_custom_call.1} parent=79 // pred_region
          %p544 = scmp.lt.s32.totalorder %s41, 1
          %s545 = scalar_select %p544, %s41, 1
          %s546 = smul.addr %s545, 8
          %s547 = scalar_lea.vmem %s1, %s546
        $region84: #{tpu_custom_call.1} parent=79 // pred_fallthru
          _
      $region80: #{tpu_custom_call.1} parent=5 // pred_fallthru
        _
      %p548 = scmp.le.s32.totalorder 1, %s34
      %p549 = scmp.lt.s32.totalorder %s34, 3
      %p550 = pnand %p548, %p549
      %p551 = pneg %p550
      // Predicated region
      $region85: #{tpu_custom_call.1} parent=5 // pred_check
        _
      $region86: #{tpu_custom_call.1} parent=5 // pred_check_branch
        %553 = sbr.rel (%p550) target = $region88
      $region87: #{tpu_custom_call.1} parent=5 // pred_region
        %s554 = ssub.s32 %s34, 1
        // Predicated region
        $region89: #{tpu_custom_call.1} parent=87 // pred_check
          %p555 = pneg %p156
        $region90: #{tpu_custom_call.1} parent=87 // pred_check_branch
          %557 = sbr.rel (%p555) target = $region92
        $region91: #{tpu_custom_call.1} parent=87 // pred_region
          %558 = dma.done [#allocation5], 64
        $region92: #{tpu_custom_call.1} parent=87 // pred_fallthru
          _
        // Predicated region
        $region93: #{tpu_custom_call.1} parent=87 // pred_check
          %p559 = pneg %p198
        $region94: #{tpu_custom_call.1} parent=87 // pred_check_branch
          %561 = sbr.rel (%p559) target = $region96
        $region95: #{tpu_custom_call.1} parent=87 // pred_region
          %562 = dma.done [#allocation8], 64
        $region96: #{tpu_custom_call.1} parent=87 // pred_fallthru
          _
        // Predicated region
        $region97: #{tpu_custom_call.1} parent=87 // pred_check
          %p563 = pneg %p261
        $region98: #{tpu_custom_call.1} parent=87 // pred_check_branch
          %565 = sbr.rel (%p563) target = $region100
        $region99: #{tpu_custom_call.1} parent=87 // pred_region
          %566 = dma.done [#allocation8], 256
        $region100: #{tpu_custom_call.1} parent=87 // pred_fallthru
          _
        // Predicated region
        $region101: #{tpu_custom_call.1} parent=87 // pred_check
          %p567 = pneg %p282
        $region102: #{tpu_custom_call.1} parent=87 // pred_check_branch
          %569 = sbr.rel (%p567) target = $region104
        $region103: #{tpu_custom_call.1} parent=87 // pred_region
          %570 = dma.done [#allocation11], 16
        $region104: #{tpu_custom_call.1} parent=87 // pred_fallthru
          _
        %p571 = scmp.lt.s32.totalorder %s43, 1
        %s572 = scalar_select %p571, %s43, 1
        %s573 = smul.addr %s572, 8
        %s574 = scalar_lea.vmem %s1, %s573
        %p575 = pneg %p72
        %p576 = pneg %p69
        %p577 = pneg %p93
        %p578 = pneg %p90
        %p579 = pneg %p114
        %p580 = pneg %p111
        %p581 = pneg %p135
        %p582 = pneg %p132
        %p583 = pneg %p156
        %p584 = pneg %p153
        %p585 = pneg %p177
        %p586 = pneg %p174
        %p587 = pneg %p198
        %p588 = pneg %p195
        %p589 = pneg %p219
        %p590 = pneg %p216
        %p591 = pneg %p240
        %p592 = pneg %p237
        %p593 = pneg %p261
        %p594 = pneg %p258
        %p595 = pneg %p282
        %p596 = pneg %p279
        %p597 = pneg %p303
        %p598 = pneg %p300
        %p599 = pneg %p324
        %p600 = pneg %p321
        %p601 = pneg %p345
        %p602 = pneg %p342
        %p603 = pneg %p366
        %p604 = pneg %p363
        %p605 = pneg %p387
        %p606 = pneg %p384
        %p607 = pneg %p408
        %p608 = pneg %p405
        %p609 = pneg %p436
        %p610 = pneg %p433
        %s611 = sand.u32 %s423, 1
        %s612 = scalar_lea.sflag [#allocation6], %s611
        %s613 = sand.u32 %s423, 1
        %s614 = smul.addr %s613, 8
        %s615 = scalar_lea.vmem [#allocation12], %s614
        %p616 = scmp.lt.s32.totalorder %s43, 1
        %s617 = scalar_select %p616, %s43, 1
        %s618 = smul.addr %s617, 8
        %s619 = scalar_lea.vmem %s1, %s618
        %s621 = sld [smem:[#allocation3 + %s43]]
        %v622 = vld [vmem:[%s619] sm:$0xff]
        %v623 = vld [vmem:[%s14] sm:$0x1]
        %v624 = vld [vmem:[%s15] sm:$0x1]
        %vm625 = vcmask 261120
        %v626 = vsel %vm625, %v622, 0.0
        %627 = vadd.xlane.f32.xlu0 %v626
        %v628 = vpop.xlane.xlu0 %627
        %v629 = vrcp.pop 32.0
        %v630 = vmul.f32 %v628, %v629
        %v631 = vsub.f32 %v622, %v630
        %v632 = vmul.f32 %v631, %v631
        %v633 = vsel %vm625, %v632, 0.0
        %634 = vadd.xlane.f32.xlu0 %v633
        %v635 = vpop.xlane.xlu0 %634
        %v636 = vmul.f32 %v635, 0.032258064
        %v637 = vrsqrt.pop %v636
        %v638 = vmul.f32 %v636, %v637
        %vm639 = vcmp.eq.f32.partialorder %v636, inf
        %v640 = vsel %vm639, %v636, %v638
        %vm641 = vcmp.eq.f32.partialorder %v636, 0.0
        %v642 = vand.u32 %v636, 2147483648
        %v643 = vsel %vm641, %v642, %v640
        %v644 = vadd.f32 %v643, 1e-06
        %v645 = vrcp.pop %v644
        %v646 = vmul.f32 %v631, %v645
        %v648 = vlaneseq
        %v649 = vshrl.u32 %v648, 7
        %v650 = vsub.s32 0, %v649
        %v651 = vrot.slane %v623, %v650
        %v653 = vmul.f32 %v651, %v646
        %v655 = vlaneseq
        %v656 = vshrl.u32 %v655, 7
        %v657 = vsub.s32 0, %v656
        %v658 = vrot.slane %v624, %v657
        %v660 = vadd.f32 %v653, %v658
        %v661 = vpack.c.bf16 %v660, %v660
        %v662 = vld [vmem:[%s4] sm:$0xf]
        %v663 = vld [vmem:[%s4 + $0x4] sm:$0xf]
        %v664 = vld [vmem:[%s4 + $0x8] sm:$0xf]
        %v665 = vld [vmem:[%s4 + $0xc] sm:$0xf]
        %v666 = vld [vmem:[#allocation4] sm:$0x1]
        %v667 = vld [vmem:[#allocation4 + $0x1] sm:$0x1]
        %v668 = vld [vmem:[#allocation4 + $0x2] sm:$0x1]
        %v669 = vld [vmem:[#allocation4 + $0x3] sm:$0x1]
        %v674 = vlaneseq
        %v675 = vshrl.u32 %v674, 7
        %v676 = vsub.s32 0, %v675
        %v677 = vrot.slane %v666, %v676
        %v678 = vlaneseq
        %v679 = vshrl.u32 %v678, 7
        %v680 = vsub.s32 0, %v679
        %v681 = vrot.slane %v667, %v680
        %v682 = vlaneseq
        %v683 = vshrl.u32 %v682, 7
        %v684 = vsub.s32 0, %v683
        %v685 = vrot.slane %v668, %v684
        %v686 = vlaneseq
        %v687 = vshrl.u32 %v686, 7
        %v688 = vsub.s32 0, %v687
        %v689 = vrot.slane %v669, %v688
        %v695 = vsel %vm625, %v661, 0
        %v698 = vsel %vm625, %v662, 0
        %700 = vmatprep.subr.bf16.mxu0 0
        %701 = vmatpush1.bf16.xpose.msra.mxu0 0
        %702 = vmatprep.subr.bf16.mxu0 0
        %703 = vmatpush1.bf16.xpose.msra.mxu0 0
        %704 = vmatprep.subr.bf16.mxu0 0
        %705 = vmatpush1.bf16.xpose.msra.mxu0 0
        %706 = vmatprep.subr.bf16.mxu0 0
        %707 = vmatpush1.bf16.xpose.msra.mxu0 0
        %708 = vmatprep.subr.bf16.mxu0 0
        %709 = vmatpush1.bf16.xpose.msra.mxu0 0
        %710 = vmatprep.subr.bf16.mxu0 0
        %711 = vmatpush1.bf16.xpose.msra.mxu0 0
        %712 = vmatprep.subr.bf16.mxu0 0
        %713 = vmatpush1.bf16.xpose.msra.mxu0 0
        %714 = vmatprep.subr.bf16.mxu0 0
        %715 = vmatpush1.bf16.xpose.msra.mxu0 %v698
        %716 = vmatprep.subr.bf16.mxu0 0
        %717 = vmatpush2.bf16.xpose.msra.mxu0 0
        %718 = vmatprep.subr.bf16.mxu0 0
        %719 = vmatpush2.bf16.xpose.msra.mxu0 0
        %720 = vmatprep.subr.bf16.mxu0 0
        %721 = vmatpush2.bf16.xpose.msra.mxu0 0
        %722 = vmatprep.subr.bf16.mxu0 0
        %723 = vmatpush2.bf16.xpose.msra.mxu0 0
        %724 = vmatprep.subr.bf16.mxu0 0
        %725 = vmatpush2.bf16.xpose.msra.mxu0 0
        %726 = vmatprep.subr.bf16.mxu0 0
        %727 = vmatpush2.bf16.xpose.msra.mxu0 0
        %728 = vmatprep.subr.bf16.mxu0 0
        %729 = vmatpush2.bf16.xpose.msra.mxu0 0
        %730 = vmatprep.subr.bf16.mxu0 0
        %731 = vmatpush2.bf16.xpose.msra.mxu0 0
        %732 = vmatprep.mubr.bf16.mxu0 0
        %733 = vmatmul.mubr.bf16.gmra.mxu0 %v695
        %v734 = vpop.f32.mrf.mxu0
        %v735 = vadd.f32 %v677, %v734
        %v736 = vpop.f32.mrf.mxu0
        %v737 = vpop.f32.mrf.mxu0
        %v738 = vpop.f32.mrf.mxu0
        %739 = vdwg.mxu0
        %v741 = vsel %vm625, %v663, 0
        %743 = vmatprep.subr.bf16.mxu0 0
        %744 = vmatpush1.bf16.xpose.msra.mxu0 0
        %745 = vmatprep.subr.bf16.mxu0 0
        %746 = vmatpush1.bf16.xpose.msra.mxu0 0
        %747 = vmatprep.subr.bf16.mxu0 0
        %748 = vmatpush1.bf16.xpose.msra.mxu0 0
        %749 = vmatprep.subr.bf16.mxu0 0
        %750 = vmatpush1.bf16.xpose.msra.mxu0 0
        %751 = vmatprep.subr.bf16.mxu0 0
        %752 = vmatpush1.bf16.xpose.msra.mxu0 0
        %753 = vmatprep.subr.bf16.mxu0 0
        %754 = vmatpush1.bf16.xpose.msra.mxu0 0
        %755 = vmatprep.subr.bf16.mxu0 0
        %756 = vmatpush1.bf16.xpose.msra.mxu0 0
        %757 = vmatprep.subr.bf16.mxu0 0
        %758 = vmatpush1.bf16.xpose.msra.mxu0 %v741
        %759 = vmatprep.subr.bf16.mxu0 0
        %760 = vmatpush2.bf16.xpose.msra.mxu0 0
        %761 = vmatprep.subr.bf16.mxu0 0
        %762 = vmatpush2.bf16.xpose.msra.mxu0 0
        %763 = vmatprep.subr.bf16.mxu0 0
        %764 = vmatpush2.bf16.xpose.msra.mxu0 0
        %765 = vmatprep.subr.bf16.mxu0 0
        %766 = vmatpush2.bf16.xpose.msra.mxu0 0
        %767 = vmatprep.subr.bf16.mxu0 0
        %768 = vmatpush2.bf16.xpose.msra.mxu0 0
        %769 = vmatprep.subr.bf16.mxu0 0
        %770 = vmatpush2.bf16.xpose.msra.mxu0 0
        %771 = vmatprep.subr.bf16.mxu0 0
        %772 = vmatpush2.bf16.xpose.msra.mxu0 0
        %773 = vmatprep.subr.bf16.mxu0 0
        %774 = vmatpush2.bf16.xpose.msra.mxu0 0
        %775 = vmatprep.mubr.bf16.mxu0 0
        %776 = vmatmul.mubr.bf16.gmra.mxu0 %v695
        %v777 = vpop.f32.mrf.mxu0
        %v778 = vadd.f32 %v681, %v777
        %v779 = vpop.f32.mrf.mxu0
        %v780 = vpop.f32.mrf.mxu0
        %v781 = vpop.f32.mrf.mxu0
        %782 = vdwg.mxu0
        %v784 = vsel %vm625, %v664, 0
        %786 = vmatprep.subr.bf16.mxu0 0
        %787 = vmatpush1.bf16.xpose.msra.mxu0 0
        %788 = vmatprep.subr.bf16.mxu0 0
        %789 = vmatpush1.bf16.xpose.msra.mxu0 0
        %790 = vmatprep.subr.bf16.mxu0 0
        %791 = vmatpush1.bf16.xpose.msra.mxu0 0
        %792 = vmatprep.subr.bf16.mxu0 0
        %793 = vmatpush1.bf16.xpose.msra.mxu0 0
        %794 = vmatprep.subr.bf16.mxu0 0
        %795 = vmatpush1.bf16.xpose.msra.mxu0 0
        %796 = vmatprep.subr.bf16.mxu0 0
        %797 = vmatpush1.bf16.xpose.msra.mxu0 0
        %798 = vmatprep.subr.bf16.mxu0 0
        %799 = vmatpush1.bf16.xpose.msra.mxu0 0
        %800 = vmatprep.subr.bf16.mxu0 0
        %801 = vmatpush1.bf16.xpose.msra.mxu0 %v784
        %802 = vmatprep.subr.bf16.mxu0 0
        %803 = vmatpush2.bf16.xpose.msra.mxu0 0
        %804 = vmatprep.subr.bf16.mxu0 0
        %805 = vmatpush2.bf16.xpose.msra.mxu0 0
        %806 = vmatprep.subr.bf16.mxu0 0
        %807 = vmatpush2.bf16.xpose.msra.mxu0 0
        %808 = vmatprep.subr.bf16.mxu0 0
        %809 = vmatpush2.bf16.xpose.msra.mxu0 0
        %810 = vmatprep.subr.bf16.mxu0 0
        %811 = vmatpush2.bf16.xpose.msra.mxu0 0
        %812 = vmatprep.subr.bf16.mxu0 0
        %813 = vmatpush2.bf16.xpose.msra.mxu0 0
        %814 = vmatprep.subr.bf16.mxu0 0
        %815 = vmatpush2.bf16.xpose.msra.mxu0 0
        %816 = vmatprep.subr.bf16.mxu0 0
        %817 = vmatpush2.bf16.xpose.msra.mxu0 0
        %818 = vmatprep.mubr.bf16.mxu0 0
        %819 = vmatmul.mubr.bf16.gmra.mxu0 %v695
        %v820 = vpop.f32.mrf.mxu0
        %v821 = vadd.f32 %v685, %v820
        %v822 = vpop.f32.mrf.mxu0
        %v823 = vpop.f32.mrf.mxu0
        %v824 = vpop.f32.mrf.mxu0
        %825 = vdwg.mxu0
        %v827 = vsel %vm625, %v665, 0
        %829 = vmatprep.subr.bf16.mxu0 0
        %830 = vmatpush1.bf16.xpose.msra.mxu0 0
        %831 = vmatprep.subr.bf16.mxu0 0
        %832 = vmatpush1.bf16.xpose.msra.mxu0 0
        %833 = vmatprep.subr.bf16.mxu0 0
        %834 = vmatpush1.bf16.xpose.msra.mxu0 0
        %835 = vmatprep.subr.bf16.mxu0 0
        %836 = vmatpush1.bf16.xpose.msra.mxu0 0
        %837 = vmatprep.subr.bf16.mxu0 0
        %838 = vmatpush1.bf16.xpose.msra.mxu0 0
        %839 = vmatprep.subr.bf16.mxu0 0
        %840 = vmatpush1.bf16.xpose.msra.mxu0 0
        %841 = vmatprep.subr.bf16.mxu0 0
        %842 = vmatpush1.bf16.xpose.msra.mxu0 0
        %843 = vmatprep.subr.bf16.mxu0 0
        %844 = vmatpush1.bf16.xpose.msra.mxu0 %v827
        %845 = vmatprep.subr.bf16.mxu0 0
        %846 = vmatpush2.bf16.xpose.msra.mxu0 0
        %847 = vmatprep.subr.bf16.mxu0 0
        %848 = vmatpush2.bf16.xpose.msra.mxu0 0
        %849 = vmatprep.subr.bf16.mxu0 0
        %850 = vmatpush2.bf16.xpose.msra.mxu0 0
        %851 = vmatprep.subr.bf16.mxu0 0
        %852 = vmatpush2.bf16.xpose.msra.mxu0 0
        %853 = vmatprep.subr.bf16.mxu0 0
        %854 = vmatpush2.bf16.xpose.msra.mxu0 0
        %855 = vmatprep.subr.bf16.mxu0 0
        %856 = vmatpush2.bf16.xpose.msra.mxu0 0
        %857 = vmatprep.subr.bf16.mxu0 0
        %858 = vmatpush2.bf16.xpose.msra.mxu0 0
        %859 = vmatprep.subr.bf16.mxu0 0
        %860 = vmatpush2.bf16.xpose.msra.mxu0 0
        %861 = vmatprep.mubr.bf16.mxu0 0
        %862 = vmatmul.mubr.bf16.gmra.mxu0 %v695
        %v863 = vpop.f32.mrf.mxu0
        %v864 = vadd.f32 %v689, %v863
        %v865 = vpop.f32.mrf.mxu0
        %v866 = vpop.f32.mrf.mxu0
        %v867 = vpop.f32.mrf.mxu0
        %868 = vdwg.mxu0
        %v869 = vld [vmem:[%s6] sm:$0xf]
        %v870 = vld [vmem:[%s6 + $0x4] sm:$0xf]
        %v871 = vld [vmem:[%s6 + $0x8] sm:$0xf]
        %v872 = vld [vmem:[%s6 + $0xc] sm:$0xf]
        %v873 = vld [vmem:[#allocation7] sm:$0x1]
        %v874 = vld [vmem:[#allocation7 + $0x1] sm:$0x1]
        %v875 = vld [vmem:[#allocation7 + $0x2] sm:$0x1]
        %v876 = vld [vmem:[#allocation7 + $0x3] sm:$0x1]
        %v881 = vlaneseq
        %v882 = vshrl.u32 %v881, 7
        %v883 = vsub.s32 0, %v882
        %v884 = vrot.slane %v873, %v883
        %v885 = vlaneseq
        %v886 = vshrl.u32 %v885, 7
        %v887 = vsub.s32 0, %v886
        %v888 = vrot.slane %v874, %v887
        %v889 = vlaneseq
        %v890 = vshrl.u32 %v889, 7
        %v891 = vsub.s32 0, %v890
        %v892 = vrot.slane %v875, %v891
        %v893 = vlaneseq
        %v894 = vshrl.u32 %v893, 7
        %v895 = vsub.s32 0, %v894
        %v896 = vrot.slane %v876, %v895
        %v902 = vsel %vm625, %v869, 0
        %904 = vmatprep.subr.bf16.mxu0 0
        %905 = vmatpush1.bf16.xpose.msra.mxu0 0
        %906 = vmatprep.subr.bf16.mxu0 0
        %907 = vmatpush1.bf16.xpose.msra.mxu0 0
        %908 = vmatprep.subr.bf16.mxu0 0
        %909 = vmatpush1.bf16.xpose.msra.mxu0 0
        %910 = vmatprep.subr.bf16.mxu0 0
        %911 = vmatpush1.bf16.xpose.msra.mxu0 0
        %912 = vmatprep.subr.bf16.mxu0 0
        %913 = vmatpush1.bf16.xpose.msra.mxu0 0
        %914 = vmatprep.subr.bf16.mxu0 0
        %915 = vmatpush1.bf16.xpose.msra.mxu0 0
        %916 = vmatprep.subr.bf16.mxu0 0
        %917 = vmatpush1.bf16.xpose.msra.mxu0 0
        %918 = vmatprep.subr.bf16.mxu0 0
        %919 = vmatpush1.bf16.xpose.msra.mxu0 %v902
        %920 = vmatprep.subr.bf16.mxu0 0
        %921 = vmatpush2.bf16.xpose.msra.mxu0 0
        %922 = vmatprep.subr.bf16.mxu0 0
        %923 = vmatpush2.bf16.xpose.msra.mxu0 0
        %924 = vmatprep.subr.bf16.mxu0 0
        %925 = vmatpush2.bf16.xpose.msra.mxu0 0
        %926 = vmatprep.subr.bf16.mxu0 0
        %927 = vmatpush2.bf16.xpose.msra.mxu0 0
        %928 = vmatprep.subr.bf16.mxu0 0
        %929 = vmatpush2.bf16.xpose.msra.mxu0 0
        %930 = vmatprep.subr.bf16.mxu0 0
        %931 = vmatpush2.bf16.xpose.msra.mxu0 0
        %932 = vmatprep.subr.bf16.mxu0 0
        %933 = vmatpush2.bf16.xpose.msra.mxu0 0
        %934 = vmatprep.subr.bf16.mxu0 0
        %935 = vmatpush2.bf16.xpose.msra.mxu0 0
        %936 = vmatprep.mubr.bf16.mxu0 0
        %937 = vmatmul.mubr.bf16.gmra.mxu0 %v695
        %v938 = vpop.f32.mrf.mxu0
        %v939 = vadd.f32 %v884, %v938
        %v940 = vpop.f32.mrf.mxu0
        %v941 = vpop.f32.mrf.mxu0
        %v942 = vpop.f32.mrf.mxu0
        %943 = vdwg.mxu0
        %v945 = vsel %vm625, %v870, 0
        %947 = vmatprep.subr.bf16.mxu0 0
        %948 = vmatpush1.bf16.xpose.msra.mxu0 0
        %949 = vmatprep.subr.bf16.mxu0 0
        %950 = vmatpush1.bf16.xpose.msra.mxu0 0
        %951 = vmatprep.subr.bf16.mxu0 0
        %952 = vmatpush1.bf16.xpose.msra.mxu0 0
        %953 = vmatprep.subr.bf16.mxu0 0
        %954 = vmatpush1.bf16.xpose.msra.mxu0 0
        %955 = vmatprep.subr.bf16.mxu0 0
        %956 = vmatpush1.bf16.xpose.msra.mxu0 0
        %957 = vmatprep.subr.bf16.mxu0 0
        %958 = vmatpush1.bf16.xpose.msra.mxu0 0
        %959 = vmatprep.subr.bf16.mxu0 0
        %960 = vmatpush1.bf16.xpose.msra.mxu0 0
        %961 = vmatprep.subr.bf16.mxu0 0
        %962 = vmatpush1.bf16.xpose.msra.mxu0 %v945
        %963 = vmatprep.subr.bf16.mxu0 0
        %964 = vmatpush2.bf16.xpose.msra.mxu0 0
        %965 = vmatprep.subr.bf16.mxu0 0
        %966 = vmatpush2.bf16.xpose.msra.mxu0 0
        %967 = vmatprep.subr.bf16.mxu0 0
        %968 = vmatpush2.bf16.xpose.msra.mxu0 0
        %969 = vmatprep.subr.bf16.mxu0 0
        %970 = vmatpush2.bf16.xpose.msra.mxu0 0
        %971 = vmatprep.subr.bf16.mxu0 0
        %972 = vmatpush2.bf16.xpose.msra.mxu0 0
        %973 = vmatprep.subr.bf16.mxu0 0
        %974 = vmatpush2.bf16.xpose.msra.mxu0 0
        %975 = vmatprep.subr.bf16.mxu0 0
        %976 = vmatpush2.bf16.xpose.msra.mxu0 0
        %977 = vmatprep.subr.bf16.mxu0 0
        %978 = vmatpush2.bf16.xpose.msra.mxu0 0
        %979 = vmatprep.mubr.bf16.mxu0 0
        %980 = vmatmul.mubr.bf16.gmra.mxu0 %v695
        %v981 = vpop.f32.mrf.mxu0
        %v982 = vadd.f32 %v888, %v981
        %v983 = vpop.f32.mrf.mxu0
        %v984 = vpop.f32.mrf.mxu0
        %v985 = vpop.f32.mrf.mxu0
        %986 = vdwg.mxu0
        %v988 = vsel %vm625, %v871, 0
        %990 = vmatprep.subr.bf16.mxu0 0
        %991 = vmatpush1.bf16.xpose.msra.mxu0 0
        %992 = vmatprep.subr.bf16.mxu0 0
        %993 = vmatpush1.bf16.xpose.msra.mxu0 0
        %994 = vmatprep.subr.bf16.mxu0 0
        %995 = vmatpush1.bf16.xpose.msra.mxu0 0
        %996 = vmatprep.subr.bf16.mxu0 0
        %997 = vmatpush1.bf16.xpose.msra.mxu0 0
        %998 = vmatprep.subr.bf16.mxu0 0
        %999 = vmatpush1.bf16.xpose.msra.mxu0 0
        %1000 = vmatprep.subr.bf16.mxu0 0
        %1001 = vmatpush1.bf16.xpose.msra.mxu0 0
        %1002 = vmatprep.subr.bf16.mxu0 0
        %1003 = vmatpush1.bf16.xpose.msra.mxu0 0
        %1004 = vmatprep.subr.bf16.mxu0 0
        %1005 = vmatpush1.bf16.xpose.msra.mxu0 %v988
        %1006 = vmatprep.subr.bf16.mxu0 0
        %1007 = vmatpush2.bf16.xpose.msra.mxu0 0
        %1008 = vmatprep.subr.bf16.mxu0 0
        %1009 = vmatpush2.bf16.xpose.msra.mxu0 0
        %1010 = vmatprep.subr.bf16.mxu0 0
        %1011 = vmatpush2.bf16.xpose.msra.mxu0 0
        %1012 = vmatprep.subr.bf16.mxu0 0
        %1013 = vmatpush2.bf16.xpose.msra.mxu0 0
        %1014 = vmatprep.subr.bf16.mxu0 0
        %1015 = vmatpush2.bf16.xpose.msra.mxu0 0
        %1016 = vmatprep.subr.bf16.mxu0 0
        %1017 = vmatpush2.bf16.xpose.msra.mxu0 0
        %1018 = vmatprep.subr.bf16.mxu0 0
        %1019 = vmatpush2.bf16.xpose.msra.mxu0 0
        %1020 = vmatprep.subr.bf16.mxu0 0
        %1021 = vmatpush2.bf16.xpose.msra.mxu0 0
        %1022 = vmatprep.mubr.bf16.mxu0 0
        %1023 = vmatmul.mubr.bf16.gmra.mxu0 %v695
        %v1024 = vpop.f32.mrf.mxu0
        %v1025 = vadd.f32 %v892, %v1024
        %v1026 = vpop.f32.mrf.mxu0
        %v1027 = vpop.f32.mrf.mxu0
        %v1028 = vpop.f32.mrf.mxu0
        %1029 = vdwg.mxu0
        %v1031 = vsel %vm625, %v872, 0
        %1033 = vmatprep.subr.bf16.mxu0 0
        %1034 = vmatpush1.bf16.xpose.msra.mxu0 0
        %1035 = vmatprep.subr.bf16.mxu0 0
        %1036 = vmatpush1.bf16.xpose.msra.mxu0 0
        %1037 = vmatprep.subr.bf16.mxu0 0
        %1038 = vmatpush1.bf16.xpose.msra.mxu0 0
        %1039 = vmatprep.subr.bf16.mxu0 0
        %1040 = vmatpush1.bf16.xpose.msra.mxu0 0
        %1041 = vmatprep.subr.bf16.mxu0 0
        %1042 = vmatpush1.bf16.xpose.msra.mxu0 0
        %1043 = vmatprep.subr.bf16.mxu0 0
        %1044 = vmatpush1.bf16.xpose.msra.mxu0 0
        %1045 = vmatprep.subr.bf16.mxu0 0
        %1046 = vmatpush1.bf16.xpose.msra.mxu0 0
        %1047 = vmatprep.subr.bf16.mxu0 0
        %1048 = vmatpush1.bf16.xpose.msra.mxu0 %v1031
        %1049 = vmatprep.subr.bf16.mxu0 0
        %1050 = vmatpush2.bf16.xpose.msra.mxu0 0
        %1051 = vmatprep.subr.bf16.mxu0 0
        %1052 = vmatpush2.bf16.xpose.msra.mxu0 0
        %1053 = vmatprep.subr.bf16.mxu0 0
        %1054 = vmatpush2.bf16.xpose.msra.mxu0 0
        %1055 = vmatprep.subr.bf16.mxu0 0
        %1056 = vmatpush2.bf16.xpose.msra.mxu0 0
        %1057 = vmatprep.subr.bf16.mxu0 0
        %1058 = vmatpush2.bf16.xpose.msra.mxu0 0
        %1059 = vmatprep.subr.bf16.mxu0 0
        %1060 = vmatpush2.bf16.xpose.msra.mxu0 0
        %1061 = vmatprep.subr.bf16.mxu0 0
        %1062 = vmatpush2.bf16.xpose.msra.mxu0 0
        %1063 = vmatprep.subr.bf16.mxu0 0
        %1064 = vmatpush2.bf16.xpose.msra.mxu0 0
        %1065 = vmatprep.mubr.bf16.mxu0 0
        %1066 = vmatmul.mubr.bf16.gmra.mxu0 %v695
        %v1067 = vpop.f32.mrf.mxu0
        %v1068 = vadd.f32 %v896, %v1067
        %v1069 = vpop.f32.mrf.mxu0
        %v1070 = vpop.f32.mrf.mxu0
        %v1071 = vpop.f32.mrf.mxu0
        %1072 = vdwg.mxu0
        %v1073 = vpack.c.bf16 %v735, %v735
        %v1074 = vpack.c.bf16 %v778, %v778
        %v1075 = vpack.c.bf16 %v821, %v821
        %v1076 = vpack.c.bf16 %v864, %v864
        %v1077 = vpack.c.bf16 %v939, %v939
        %v1078 = vpack.c.bf16 %v982, %v982
        %v1079 = vpack.c.bf16 %v1025, %v1025
        %v1080 = vpack.c.bf16 %v1068, %v1068
        %v1081 = vld [vmem:[%s2] sm:$0xf]
        %v1082 = vld [vmem:[%s2 + $0x4] sm:$0xf]
        %v1083 = vld [vmem:[%s2 + $0x8] sm:$0xf]
        %v1084 = vld [vmem:[%s2 + $0xc] sm:$0xf]
        %v1085 = vld [vmem:[%s3] sm:$0x1]
        %v1086 = vld [vmem:[%s3 + $0x1] sm:$0x1]
        %v1087 = vld [vmem:[%s3 + $0x2] sm:$0x1]
        %v1088 = vld [vmem:[%s3 + $0x3] sm:$0x1]
        %v1093 = vlaneseq
        %v1094 = vshrl.u32 %v1093, 7
        %v1095 = vsub.s32 0, %v1094
        %v1096 = vrot.slane %v1085, %v1095
        %v1097 = vlaneseq
        %v1098 = vshrl.u32 %v1097, 7
        %v1099 = vsub.s32 0, %v1098
        %v1100 = vrot.slane %v1086, %v1099
        %v1101 = vlaneseq
        %v1102 = vshrl.u32 %v1101, 7
        %v1103 = vsub.s32 0, %v1102
        %v1104 = vrot.slane %v1087, %v1103
        %v1105 = vlaneseq
        %v1106 = vshrl.u32 %v1105, 7
        %v1107 = vsub.s32 0, %v1106
        %v1108 = vrot.slane %v1088, %v1107
        %v1114 = vsel %vm625, %v1081, 0
        %1116 = vmatprep.subr.bf16.mxu0 0
        %1117 = vmatpush1.bf16.xpose.msra.mxu0 0
        %1118 = vmatprep.subr.bf16.mxu0 0
        %1119 = vmatpush1.bf16.xpose.msra.mxu0 0
        %1120 = vmatprep.subr.bf16.mxu0 0
        %1121 = vmatpush1.bf16.xpose.msra.mxu0 0
        %1122 = vmatprep.subr.bf16.mxu0 0
        %1123 = vmatpush1.bf16.xpose.msra.mxu0 0
        %1124 = vmatprep.subr.bf16.mxu0 0
        %1125 = vmatpush1.bf16.xpose.msra.mxu0 0
        %1126 = vmatprep.subr.bf16.mxu0 0
        %1127 = vmatpush1.bf16.xpose.msra.mxu0 0
        %1128 = vmatprep.subr.bf16.mxu0 0
        %1129 = vmatpush1.bf16.xpose.msra.mxu0 0
        %1130 = vmatprep.subr.bf16.mxu0 0
        %1131 = vmatpush1.bf16.xpose.msra.mxu0 %v1114
        %1132 = vmatprep.subr.bf16.mxu0 0
        %1133 = vmatpush2.bf16.xpose.msra.mxu0 0
        %1134 = vmatprep.subr.bf16.mxu0 0
        %1135 = vmatpush2.bf16.xpose.msra.mxu0 0
        %1136 = vmatprep.subr.bf16.mxu0 0
        %1137 = vmatpush2.bf16.xpose.msra.mxu0 0
        %1138 = vmatprep.subr.bf16.mxu0 0
        %1139 = vmatpush2.bf16.xpose.msra.mxu0 0
        %1140 = vmatprep.subr.bf16.mxu0 0
        %1141 = vmatpush2.bf16.xpose.msra.mxu0 0
        %1142 = vmatprep.subr.bf16.mxu0 0
        %1143 = vmatpush2.bf16.xpose.msra.mxu0 0
        %1144 = vmatprep.subr.bf16.mxu0 0
        %1145 = vmatpush2.bf16.xpose.msra.mxu0 0
        %1146 = vmatprep.subr.bf16.mxu0 0
        %1147 = vmatpush2.bf16.xpose.msra.mxu0 0
        %1148 = vmatprep.mubr.bf16.mxu0 0
        %1149 = vmatmul.mubr.bf16.gmra.mxu0 %v695
        %v1150 = vpop.f32.mrf.mxu0
        %v1151 = vadd.f32 %v1096, %v1150
        %v1152 = vpop.f32.mrf.mxu0
        %v1153 = vpop.f32.mrf.mxu0
        %v1154 = vpop.f32.mrf.mxu0
        %1155 = vdwg.mxu0
        %v1157 = vsel %vm625, %v1082, 0
        %1159 = vmatprep.subr.bf16.mxu0 0
        %1160 = vmatpush1.bf16.xpose.msra.mxu0 0
        %1161 = vmatprep.subr.bf16.mxu0 0
        %1162 = vmatpush1.bf16.xpose.msra.mxu0 0
        %1163 = vmatprep.subr.bf16.mxu0 0
        %1164 = vmatpush1.bf16.xpose.msra.mxu0 0
        %1165 = vmatprep.subr.bf16.mxu0 0
        %1166 = vmatpush1.bf16.xpose.msra.mxu0 0
        %1167 = vmatprep.subr.bf16.mxu0 0
        %1168 = vmatpush1.bf16.xpose.msra.mxu0 0
        %1169 = vmatprep.subr.bf16.mxu0 0
        %1170 = vmatpush1.bf16.xpose.msra.mxu0 0
        %1171 = vmatprep.subr.bf16.mxu0 0
        %1172 = vmatpush1.bf16.xpose.msra.mxu0 0
        %1173 = vmatprep.subr.bf16.mxu0 0
        %1174 = vmatpush1.bf16.xpose.msra.mxu0 %v1157
        %1175 = vmatprep.subr.bf16.mxu0 0
        %1176 = vmatpush2.bf16.xpose.msra.mxu0 0
        %1177 = vmatprep.subr.bf16.mxu0 0
        %1178 = vmatpush2.bf16.xpose.msra.mxu0 0
        %1179 = vmatprep.subr.bf16.mxu0 0
        %1180 = vmatpush2.bf16.xpose.msra.mxu0 0
        %1181 = vmatprep.subr.bf16.mxu0 0
        %1182 = vmatpush2.bf16.xpose.msra.mxu0 0
        %1183 = vmatprep.subr.bf16.mxu0 0
        %1184 = vmatpush2.bf16.xpose.msra.mxu0 0
        %1185 = vmatprep.subr.bf16.mxu0 0
        %1186 = vmatpush2.bf16.xpose.msra.mxu0 0
        %1187 = vmatprep.subr.bf16.mxu0 0
        %1188 = vmatpush2.bf16.xpose.msra.mxu0 0
        %1189 = vmatprep.subr.bf16.mxu0 0
        %1190 = vmatpush2.bf16.xpose.msra.mxu0 0
        %1191 = vmatprep.mubr.bf16.mxu0 0
        %1192 = vmatmul.mubr.bf16.gmra.mxu0 %v695
        %v1193 = vpop.f32.mrf.mxu0
        %v1194 = vadd.f32 %v1100, %v1193
        %v1195 = vpop.f32.mrf.mxu0
        %v1196 = vpop.f32.mrf.mxu0
        %v1197 = vpop.f32.mrf.mxu0
        %1198 = vdwg.mxu0
        %v1200 = vsel %vm625, %v1083, 0
        %1202 = vmatprep.subr.bf16.mxu0 0
        %1203 = vmatpush1.bf16.xpose.msra.mxu0 0
        %1204 = vmatprep.subr.bf16.mxu0 0
        %1205 = vmatpush1.bf16.xpose.msra.mxu0 0
        %1206 = vmatprep.subr.bf16.mxu0 0
        %1207 = vmatpush1.bf16.xpose.msra.mxu0 0
        %1208 = vmatprep.subr.bf16.mxu0 0
        %1209 = vmatpush1.bf16.xpose.msra.mxu0 0
        %1210 = vmatprep.subr.bf16.mxu0 0
        %1211 = vmatpush1.bf16.xpose.msra.mxu0 0
        %1212 = vmatprep.subr.bf16.mxu0 0
        %1213 = vmatpush1.bf16.xpose.msra.mxu0 0
        %1214 = vmatprep.subr.bf16.mxu0 0
        %1215 = vmatpush1.bf16.xpose.msra.mxu0 0
        %1216 = vmatprep.subr.bf16.mxu0 0
        %1217 = vmatpush1.bf16.xpose.msra.mxu0 %v1200
        %1218 = vmatprep.subr.bf16.mxu0 0
        %1219 = vmatpush2.bf16.xpose.msra.mxu0 0
        %1220 = vmatprep.subr.bf16.mxu0 0
        %1221 = vmatpush2.bf16.xpose.msra.mxu0 0
        %1222 = vmatprep.subr.bf16.mxu0 0
        %1223 = vmatpush2.bf16.xpose.msra.mxu0 0
        %1224 = vmatprep.subr.bf16.mxu0 0
        %1225 = vmatpush2.bf16.xpose.msra.mxu0 0
        %1226 = vmatprep.subr.bf16.mxu0 0
        %1227 = vmatpush2.bf16.xpose.msra.mxu0 0
        %1228 = vmatprep.subr.bf16.mxu0 0
        %1229 = vmatpush2.bf16.xpose.msra.mxu0 0
        %1230 = vmatprep.subr.bf16.mxu0 0
        %1231 = vmatpush2.bf16.xpose.msra.mxu0 0
        %1232 = vmatprep.subr.bf16.mxu0 0
        %1233 = vmatpush2.bf16.xpose.msra.mxu0 0
        %1234 = vmatprep.mubr.bf16.mxu0 0
        %1235 = vmatmul.mubr.bf16.gmra.mxu0 %v695
        %v1236 = vpop.f32.mrf.mxu0
        %v1237 = vadd.f32 %v1104, %v1236
        %v1238 = vpop.f32.mrf.mxu0
        %v1239 = vpop.f32.mrf.mxu0
        %v1240 = vpop.f32.mrf.mxu0
        %1241 = vdwg.mxu0
        %v1243 = vsel %vm625, %v1084, 0
        %1245 = vmatprep.subr.bf16.mxu0 0
        %1246 = vmatpush1.bf16.xpose.msra.mxu0 0
        %1247 = vmatprep.subr.bf16.mxu0 0
        %1248 = vmatpush1.bf16.xpose.msra.mxu0 0
        %1249 = vmatprep.subr.bf16.mxu0 0
        %1250 = vmatpush1.bf16.xpose.msra.mxu0 0
        %1251 = vmatprep.subr.bf16.mxu0 0
        %1252 = vmatpush1.bf16.xpose.msra.mxu0 0
        %1253 = vmatprep.subr.bf16.mxu0 0
        %1254 = vmatpush1.bf16.xpose.msra.mxu0 0
        %1255 = vmatprep.subr.bf16.mxu0 0
        %1256 = vmatpush1.bf16.xpose.msra.mxu0 0
        %1257 = vmatprep.subr.bf16.mxu0 0
        %1258 = vmatpush1.bf16.xpose.msra.mxu0 0
        %1259 = vmatprep.subr.bf16.mxu0 0
        %1260 = vmatpush1.bf16.xpose.msra.mxu0 %v1243
        %1261 = vmatprep.subr.bf16.mxu0 0
        %1262 = vmatpush2.bf16.xpose.msra.mxu0 0
        %1263 = vmatprep.subr.bf16.mxu0 0
        %1264 = vmatpush2.bf16.xpose.msra.mxu0 0
        %1265 = vmatprep.subr.bf16.mxu0 0
        %1266 = vmatpush2.bf16.xpose.msra.mxu0 0
        %1267 = vmatprep.subr.bf16.mxu0 0
        %1268 = vmatpush2.bf16.xpose.msra.mxu0 0
        %1269 = vmatprep.subr.bf16.mxu0 0
        %1270 = vmatpush2.bf16.xpose.msra.mxu0 0
        %1271 = vmatprep.subr.bf16.mxu0 0
        %1272 = vmatpush2.bf16.xpose.msra.mxu0 0
        %1273 = vmatprep.subr.bf16.mxu0 0
        %1274 = vmatpush2.bf16.xpose.msra.mxu0 0
        %1275 = vmatprep.subr.bf16.mxu0 0
        %1276 = vmatpush2.bf16.xpose.msra.mxu0 0
        %1277 = vmatprep.mubr.bf16.mxu0 0
        %1278 = vmatmul.mubr.bf16.gmra.mxu0 %v695
        %v1279 = vpop.f32.mrf.mxu0
        %v1280 = vadd.f32 %v1108, %v1279
        %v1281 = vpop.f32.mrf.mxu0
        %v1282 = vpop.f32.mrf.mxu0
        %v1283 = vpop.f32.mrf.mxu0
        %1284 = vdwg.mxu0
        %v1285 = vmul.f32 %v1151, 0.35355338
        %v1286 = vmul.f32 %v1194, 0.35355338
        %v1287 = vmul.f32 %v1237, 0.35355338
        %v1288 = vmul.f32 %v1280, 0.35355338
        %v1289 = vpack.c.bf16 %v1285, %v1285
        %v1290 = vpack.c.bf16 %v1286, %v1286
        %v1291 = vpack.c.bf16 %v1287, %v1287
        %v1292 = vpack.c.bf16 %v1288, %v1288
        %vm1293 = vcmask 64512
        %v1295 = vsel %vm1293, %v1289, 0
        %v1298 = vsel %vm1293, %v1073, 0
        %1300 = vmatprep.subr.bf16.mxu0 0
        %1301 = vmatpush1.bf16.xpose.msra.mxu0 0
        %1302 = vmatprep.subr.bf16.mxu0 0
        %1303 = vmatpush1.bf16.xpose.msra.mxu0 0
        %1304 = vmatprep.subr.bf16.mxu0 0
        %1305 = vmatpush1.bf16.xpose.msra.mxu0 0
        %1306 = vmatprep.subr.bf16.mxu0 0
        %1307 = vmatpush1.bf16.xpose.msra.mxu0 0
        %1308 = vmatprep.subr.bf16.mxu0 0
        %1309 = vmatpush1.bf16.xpose.msra.mxu0 0
        %1310 = vmatprep.subr.bf16.mxu0 0
        %1311 = vmatpush1.bf16.xpose.msra.mxu0 0
        %1312 = vmatprep.subr.bf16.mxu0 0
        %1313 = vmatpush1.bf16.xpose.msra.mxu0 0
        %1314 = vmatprep.subr.bf16.mxu0 0
        %1315 = vmatpush1.bf16.xpose.msra.mxu0 %v1298
        %1316 = vmatprep.subr.bf16.mxu0 0
        %1317 = vmatpush2.bf16.xpose.msra.mxu0 0
        %1318 = vmatprep.subr.bf16.mxu0 0
        %1319 = vmatpush2.bf16.xpose.msra.mxu0 0
        %1320 = vmatprep.subr.bf16.mxu0 0
        %1321 = vmatpush2.bf16.xpose.msra.mxu0 0
        %1322 = vmatprep.subr.bf16.mxu0 0
        %1323 = vmatpush2.bf16.xpose.msra.mxu0 0
        %1324 = vmatprep.subr.bf16.mxu0 0
        %1325 = vmatpush2.bf16.xpose.msra.mxu0 0
        %1326 = vmatprep.subr.bf16.mxu0 0
        %1327 = vmatpush2.bf16.xpose.msra.mxu0 0
        %1328 = vmatprep.subr.bf16.mxu0 0
        %1329 = vmatpush2.bf16.xpose.msra.mxu0 0
        %1330 = vmatprep.subr.bf16.mxu0 0
        %1331 = vmatpush2.bf16.xpose.msra.mxu0 0
        %1332 = vmatprep.mubr.bf16.mxu0 0
        %1333 = vmatmul.mubr.bf16.gmra.mxu0 %v1295
        %v1334 = vpop.f32.mrf.mxu0
        %v1335 = vadd.f32 0.0, %v1334
        %v1336 = vpop.f32.mrf.mxu0
        %v1337 = vpop.f32.mrf.mxu0
        %v1338 = vpop.f32.mrf.mxu0
        %1339 = vdwg.mxu0
        %v1341 = vsel %vm1293, %v1290, 0
        %v1344 = vsel %vm1293, %v1074, 0
        %1346 = vmatprep.subr.bf16.mxu0 0
        %1347 = vmatpush1.bf16.xpose.msra.mxu0 0
        %1348 = vmatprep.subr.bf16.mxu0 0
        %1349 = vmatpush1.bf16.xpose.msra.mxu0 0
        %1350 = vmatprep.subr.bf16.mxu0 0
        %1351 = vmatpush1.bf16.xpose.msra.mxu0 0
        %1352 = vmatprep.subr.bf16.mxu0 0
        %1353 = vmatpush1.bf16.xpose.msra.mxu0 0
        %1354 = vmatprep.subr.bf16.mxu0 0
        %1355 = vmatpush1.bf16.xpose.msra.mxu0 0
        %1356 = vmatprep.subr.bf16.mxu0 0
        %1357 = vmatpush1.bf16.xpose.msra.mxu0 0
        %1358 = vmatprep.subr.bf16.mxu0 0
        %1359 = vmatpush1.bf16.xpose.msra.mxu0 0
        %1360 = vmatprep.subr.bf16.mxu0 0
        %1361 = vmatpush1.bf16.xpose.msra.mxu0 %v1344
        %1362 = vmatprep.subr.bf16.mxu0 0
        %1363 = vmatpush2.bf16.xpose.msra.mxu0 0
        %1364 = vmatprep.subr.bf16.mxu0 0
        %1365 = vmatpush2.bf16.xpose.msra.mxu0 0
        %1366 = vmatprep.subr.bf16.mxu0 0
        %1367 = vmatpush2.bf16.xpose.msra.mxu0 0
        %1368 = vmatprep.subr.bf16.mxu0 0
        %1369 = vmatpush2.bf16.xpose.msra.mxu0 0
        %1370 = vmatprep.subr.bf16.mxu0 0
        %1371 = vmatpush2.bf16.xpose.msra.mxu0 0
        %1372 = vmatprep.subr.bf16.mxu0 0
        %1373 = vmatpush2.bf16.xpose.msra.mxu0 0
        %1374 = vmatprep.subr.bf16.mxu0 0
        %1375 = vmatpush2.bf16.xpose.msra.mxu0 0
        %1376 = vmatprep.subr.bf16.mxu0 0
        %1377 = vmatpush2.bf16.xpose.msra.mxu0 0
        %1378 = vmatprep.mubr.bf16.mxu0 0
        %1379 = vmatmul.mubr.bf16.gmra.mxu0 %v1341
        %v1380 = vpop.f32.mrf.mxu0
        %v1381 = vadd.f32 0.0, %v1380
        %v1382 = vpop.f32.mrf.mxu0
        %v1383 = vpop.f32.mrf.mxu0
        %v1384 = vpop.f32.mrf.mxu0
        %1385 = vdwg.mxu0
        %v1387 = vsel %vm1293, %v1291, 0
        %v1390 = vsel %vm1293, %v1075, 0
        %1392 = vmatprep.subr.bf16.mxu0 0
        %1393 = vmatpush1.bf16.xpose.msra.mxu0 0
        %1394 = vmatprep.subr.bf16.mxu0 0
        %1395 = vmatpush1.bf16.xpose.msra.mxu0 0
        %1396 = vmatprep.subr.bf16.mxu0 0
        %1397 = vmatpush1.bf16.xpose.msra.mxu0 0
        %1398 = vmatprep.subr.bf16.mxu0 0
        %1399 = vmatpush1.bf16.xpose.msra.mxu0 0
        %1400 = vmatprep.subr.bf16.mxu0 0
        %1401 = vmatpush1.bf16.xpose.msra.mxu0 0
        %1402 = vmatprep.subr.bf16.mxu0 0
        %1403 = vmatpush1.bf16.xpose.msra.mxu0 0
        %1404 = vmatprep.subr.bf16.mxu0 0
        %1405 = vmatpush1.bf16.xpose.msra.mxu0 0
        %1406 = vmatprep.subr.bf16.mxu0 0
        %1407 = vmatpush1.bf16.xpose.msra.mxu0 %v1390
        %1408 = vmatprep.subr.bf16.mxu0 0
        %1409 = vmatpush2.bf16.xpose.msra.mxu0 0
        %1410 = vmatprep.subr.bf16.mxu0 0
        %1411 = vmatpush2.bf16.xpose.msra.mxu0 0
        %1412 = vmatprep.subr.bf16.mxu0 0
        %1413 = vmatpush2.bf16.xpose.msra.mxu0 0
        %1414 = vmatprep.subr.bf16.mxu0 0
        %1415 = vmatpush2.bf16.xpose.msra.mxu0 0
        %1416 = vmatprep.subr.bf16.mxu0 0
        %1417 = vmatpush2.bf16.xpose.msra.mxu0 0
        %1418 = vmatprep.subr.bf16.mxu0 0
        %1419 = vmatpush2.bf16.xpose.msra.mxu0 0
        %1420 = vmatprep.subr.bf16.mxu0 0
        %1421 = vmatpush2.bf16.xpose.msra.mxu0 0
        %1422 = vmatprep.subr.bf16.mxu0 0
        %1423 = vmatpush2.bf16.xpose.msra.mxu0 0
        %1424 = vmatprep.mubr.bf16.mxu0 0
        %1425 = vmatmul.mubr.bf16.gmra.mxu0 %v1387
        %v1426 = vpop.f32.mrf.mxu0
        %v1427 = vadd.f32 0.0, %v1426
        %v1428 = vpop.f32.mrf.mxu0
        %v1429 = vpop.f32.mrf.mxu0
        %v1430 = vpop.f32.mrf.mxu0
        %1431 = vdwg.mxu0
        %v1433 = vsel %vm1293, %v1292, 0
        %v1436 = vsel %vm1293, %v1076, 0
        %1438 = vmatprep.subr.bf16.mxu0 0
        %1439 = vmatpush1.bf16.xpose.msra.mxu0 0
        %1440 = vmatprep.subr.bf16.mxu0 0
        %1441 = vmatpush1.bf16.xpose.msra.mxu0 0
        %1442 = vmatprep.subr.bf16.mxu0 0
        %1443 = vmatpush1.bf16.xpose.msra.mxu0 0
        %1444 = vmatprep.subr.bf16.mxu0 0
        %1445 = vmatpush1.bf16.xpose.msra.mxu0 0
        %1446 = vmatprep.subr.bf16.mxu0 0
        %1447 = vmatpush1.bf16.xpose.msra.mxu0 0
        %1448 = vmatprep.subr.bf16.mxu0 0
        %1449 = vmatpush1.bf16.xpose.msra.mxu0 0
        %1450 = vmatprep.subr.bf16.mxu0 0
        %1451 = vmatpush1.bf16.xpose.msra.mxu0 0
        %1452 = vmatprep.subr.bf16.mxu0 0
        %1453 = vmatpush1.bf16.xpose.msra.mxu0 %v1436
        %1454 = vmatprep.subr.bf16.mxu0 0
        %1455 = vmatpush2.bf16.xpose.msra.mxu0 0
        %1456 = vmatprep.subr.bf16.mxu0 0
        %1457 = vmatpush2.bf16.xpose.msra.mxu0 0
        %1458 = vmatprep.subr.bf16.mxu0 0
        %1459 = vmatpush2.bf16.xpose.msra.mxu0 0
        %1460 = vmatprep.subr.bf16.mxu0 0
        %1461 = vmatpush2.bf16.xpose.msra.mxu0 0
        %1462 = vmatprep.subr.bf16.mxu0 0
        %1463 = vmatpush2.bf16.xpose.msra.mxu0 0
        %1464 = vmatprep.subr.bf16.mxu0 0
        %1465 = vmatpush2.bf16.xpose.msra.mxu0 0
        %1466 = vmatprep.subr.bf16.mxu0 0
        %1467 = vmatpush2.bf16.xpose.msra.mxu0 0
        %1468 = vmatprep.subr.bf16.mxu0 0
        %1469 = vmatpush2.bf16.xpose.msra.mxu0 0
        %1470 = vmatprep.mubr.bf16.mxu0 0
        %1471 = vmatmul.mubr.bf16.gmra.mxu0 %v1433
        %v1472 = vpop.f32.mrf.mxu0
        %v1473 = vadd.f32 0.0, %v1472
        %v1474 = vpop.f32.mrf.mxu0
        %v1475 = vpop.f32.mrf.mxu0
        %v1476 = vpop.f32.mrf.mxu0
        %1477 = vdwg.mxu0
        %v1478 = vlaneseq
        %v1479 = vand.u32 %v1478, 127
        %v1480 = vstv %s621
        %vm1481 = vcmp.ge.s32.totalorder %v1479, %v1480
        %v1482 = vsel %vm1481, -1e+09, %v1335
        %v1483 = vsel %vm1481, -1e+09, %v1381
        %v1484 = vsel %vm1481, -1e+09, %v1427
        %v1485 = vsel %vm1481, -1e+09, %v1473
        %v1486 = vsel %vm1293, %v1482, -inf
        %1487 = vmax.xlane.f32.xlu0 %v1486
        %v1488 = vpop.xlane.xlu0 %1487
        %v1489 = vsel %vm1293, %v1483, -inf
        %1490 = vmax.xlane.f32.xlu0 %v1489
        %v1491 = vpop.xlane.xlu0 %1490
        %v1492 = vsel %vm1293, %v1484, -inf
        %1493 = vmax.xlane.f32.xlu0 %v1492
        %v1494 = vpop.xlane.xlu0 %1493
        %v1495 = vsel %vm1293, %v1485, -inf
        %1496 = vmax.xlane.f32.xlu0 %v1495
        %v1497 = vpop.xlane.xlu0 %1496
        %v1498 = vsub.f32 -inf, %v1488
        %v1499 = vsub.f32 -inf, %v1491
        %v1500 = vsub.f32 -inf, %v1494
        %v1501 = vsub.f32 -inf, %v1497
        %v1502 = vmul.f32 %v1498, 1.442695
        %v1503 = vpow.pop %v1502
        %v1504 = vmul.f32 %v1499, 1.442695
        %v1505 = vpow.pop %v1504
        %v1506 = vmul.f32 %v1500, 1.442695
        %v1507 = vpow.pop %v1506
        %v1508 = vmul.f32 %v1501, 1.442695
        %v1509 = vpow.pop %v1508
        %v1510 = vsub.f32 %v1482, %v1488
        %v1511 = vsub.f32 %v1483, %v1491
        %v1512 = vsub.f32 %v1484, %v1494
        %v1513 = vsub.f32 %v1485, %v1497
        %v1514 = vmul.f32 %v1510, 1.442695
        %v1515 = vpow.pop %v1514
        %v1516 = vmul.f32 %v1511, 1.442695
        %v1517 = vpow.pop %v1516
        %v1518 = vmul.f32 %v1512, 1.442695
        %v1519 = vpow.pop %v1518
        %v1520 = vmul.f32 %v1513, 1.442695
        %v1521 = vpow.pop %v1520
        %v1522 = vmul.f32 %v1503, 0.0
        %v1523 = vmul.f32 %v1505, 0.0
        %v1524 = vmul.f32 %v1507, 0.0
        %v1525 = vmul.f32 %v1509, 0.0
        %v1526 = vsel %vm1293, %v1515, 0.0
        %1527 = vadd.xlane.f32.xlu0 %v1526
        %v1528 = vpop.xlane.xlu0 %1527
        %v1529 = vsel %vm1293, %v1517, 0.0
        %1530 = vadd.xlane.f32.xlu0 %v1529
        %v1531 = vpop.xlane.xlu0 %1530
        %v1532 = vsel %vm1293, %v1519, 0.0
        %1533 = vadd.xlane.f32.xlu0 %v1532
        %v1534 = vpop.xlane.xlu0 %1533
        %v1535 = vsel %vm1293, %v1521, 0.0
        %1536 = vadd.xlane.f32.xlu0 %v1535
        %v1537 = vpop.xlane.xlu0 %1536
        %v1538 = vadd.f32 %v1522, %v1528
        %v1539 = vadd.f32 %v1523, %v1531
        %v1540 = vadd.f32 %v1524, %v1534
        %v1541 = vadd.f32 %v1525, %v1537
        %v1542 = vpack.c.bf16 %v1515, %v1515
        %v1543 = vpack.c.bf16 %v1517, %v1517
        %v1544 = vpack.c.bf16 %v1519, %v1519
        %v1545 = vpack.c.bf16 %v1521, %v1521
        %v1547 = vsel %vm1293, %v1542, 0
        %vm1549 = vcmask 1043456
        %v1551 = vsel %vm1549, %v1077, 0
        %1553 = vmatprep.subr.bf16.mxu0 0
        %1554 = vmatpush1.bf16.msra.mxu0 0
        %1555 = vmatprep.subr.bf16.mxu0 0
        %1556 = vmatpush1.bf16.msra.mxu0 0
        %1557 = vmatprep.subr.bf16.mxu0 0
        %1558 = vmatpush1.bf16.msra.mxu0 0
        %1559 = vmatprep.subr.bf16.mxu0 0
        %1560 = vmatpush1.bf16.msra.mxu0 0
        %1561 = vmatprep.subr.bf16.mxu0 0
        %1562 = vmatpush1.bf16.msra.mxu0 0
        %1563 = vmatprep.subr.bf16.mxu0 0
        %1564 = vmatpush1.bf16.msra.mxu0 0
        %1565 = vmatprep.subr.bf16.mxu0 0
        %1566 = vmatpush1.bf16.msra.mxu0 0
        %1567 = vmatprep.subr.bf16.mxu0 0
        %1568 = vmatpush1.bf16.msra.mxu0 %v1551
        %1569 = vmatprep.subr.bf16.mxu0 0
        %1570 = vmatpush2.bf16.msra.mxu0 0
        %1571 = vmatprep.subr.bf16.mxu0 0
        %1572 = vmatpush2.bf16.msra.mxu0 0
        %1573 = vmatprep.subr.bf16.mxu0 0
        %1574 = vmatpush2.bf16.msra.mxu0 0
        %1575 = vmatprep.subr.bf16.mxu0 0
        %1576 = vmatpush2.bf16.msra.mxu0 0
        %1577 = vmatprep.subr.bf16.mxu0 0
        %1578 = vmatpush2.bf16.msra.mxu0 0
        %1579 = vmatprep.subr.bf16.mxu0 0
        %1580 = vmatpush2.bf16.msra.mxu0 0
        %1581 = vmatprep.subr.bf16.mxu0 0
        %1582 = vmatpush2.bf16.msra.mxu0 0
        %1583 = vmatprep.subr.bf16.mxu0 0
        %1584 = vmatpush2.bf16.msra.mxu0 0
        %1585 = vmatprep.mubr.bf16.mxu0 0
        %1586 = vmatmul.mubr.bf16.gmra.mxu0 %v1547
        %v1587 = vpop.f32.mrf.mxu0
        %v1588 = vadd.f32 0.0, %v1587
        %v1589 = vpop.f32.mrf.mxu0
        %v1590 = vpop.f32.mrf.mxu0
        %v1591 = vpop.f32.mrf.mxu0
        %1592 = vdwg.mxu0
        %v1594 = vsel %vm1293, %v1543, 0
        %v1597 = vsel %vm1549, %v1078, 0
        %1599 = vmatprep.subr.bf16.mxu0 0
        %1600 = vmatpush1.bf16.msra.mxu0 0
        %1601 = vmatprep.subr.bf16.mxu0 0
        %1602 = vmatpush1.bf16.msra.mxu0 0
        %1603 = vmatprep.subr.bf16.mxu0 0
        %1604 = vmatpush1.bf16.msra.mxu0 0
        %1605 = vmatprep.subr.bf16.mxu0 0
        %1606 = vmatpush1.bf16.msra.mxu0 0
        %1607 = vmatprep.subr.bf16.mxu0 0
        %1608 = vmatpush1.bf16.msra.mxu0 0
        %1609 = vmatprep.subr.bf16.mxu0 0
        %1610 = vmatpush1.bf16.msra.mxu0 0
        %1611 = vmatprep.subr.bf16.mxu0 0
        %1612 = vmatpush1.bf16.msra.mxu0 0
        %1613 = vmatprep.subr.bf16.mxu0 0
        %1614 = vmatpush1.bf16.msra.mxu0 %v1597
        %1615 = vmatprep.subr.bf16.mxu0 0
        %1616 = vmatpush2.bf16.msra.mxu0 0
        %1617 = vmatprep.subr.bf16.mxu0 0
        %1618 = vmatpush2.bf16.msra.mxu0 0
        %1619 = vmatprep.subr.bf16.mxu0 0
        %1620 = vmatpush2.bf16.msra.mxu0 0
        %1621 = vmatprep.subr.bf16.mxu0 0
        %1622 = vmatpush2.bf16.msra.mxu0 0
        %1623 = vmatprep.subr.bf16.mxu0 0
        %1624 = vmatpush2.bf16.msra.mxu0 0
        %1625 = vmatprep.subr.bf16.mxu0 0
        %1626 = vmatpush2.bf16.msra.mxu0 0
        %1627 = vmatprep.subr.bf16.mxu0 0
        %1628 = vmatpush2.bf16.msra.mxu0 0
        %1629 = vmatprep.subr.bf16.mxu0 0
        %1630 = vmatpush2.bf16.msra.mxu0 0
        %1631 = vmatprep.mubr.bf16.mxu0 0
        %1632 = vmatmul.mubr.bf16.gmra.mxu0 %v1594
        %v1633 = vpop.f32.mrf.mxu0
        %v1634 = vadd.f32 0.0, %v1633
        %v1635 = vpop.f32.mrf.mxu0
        %v1636 = vpop.f32.mrf.mxu0
        %v1637 = vpop.f32.mrf.mxu0
        %1638 = vdwg.mxu0
        %v1640 = vsel %vm1293, %v1544, 0
        %v1643 = vsel %vm1549, %v1079, 0
        %1645 = vmatprep.subr.bf16.mxu0 0
        %1646 = vmatpush1.bf16.msra.mxu0 0
        %1647 = vmatprep.subr.bf16.mxu0 0
        %1648 = vmatpush1.bf16.msra.mxu0 0
        %1649 = vmatprep.subr.bf16.mxu0 0
        %1650 = vmatpush1.bf16.msra.mxu0 0
        %1651 = vmatprep.subr.bf16.mxu0 0
        %1652 = vmatpush1.bf16.msra.mxu0 0
        %1653 = vmatprep.subr.bf16.mxu0 0
        %1654 = vmatpush1.bf16.msra.mxu0 0
        %1655 = vmatprep.subr.bf16.mxu0 0
        %1656 = vmatpush1.bf16.msra.mxu0 0
        %1657 = vmatprep.subr.bf16.mxu0 0
        %1658 = vmatpush1.bf16.msra.mxu0 0
        %1659 = vmatprep.subr.bf16.mxu0 0
        %1660 = vmatpush1.bf16.msra.mxu0 %v1643
        %1661 = vmatprep.subr.bf16.mxu0 0
        %1662 = vmatpush2.bf16.msra.mxu0 0
        %1663 = vmatprep.subr.bf16.mxu0 0
        %1664 = vmatpush2.bf16.msra.mxu0 0
        %1665 = vmatprep.subr.bf16.mxu0 0
        %1666 = vmatpush2.bf16.msra.mxu0 0
        %1667 = vmatprep.subr.bf16.mxu0 0
        %1668 = vmatpush2.bf16.msra.mxu0 0
        %1669 = vmatprep.subr.bf16.mxu0 0
        %1670 = vmatpush2.bf16.msra.mxu0 0
        %1671 = vmatprep.subr.bf16.mxu0 0
        %1672 = vmatpush2.bf16.msra.mxu0 0
        %1673 = vmatprep.subr.bf16.mxu0 0
        %1674 = vmatpush2.bf16.msra.mxu0 0
        %1675 = vmatprep.subr.bf16.mxu0 0
        %1676 = vmatpush2.bf16.msra.mxu0 0
        %1677 = vmatprep.mubr.bf16.mxu0 0
        %1678 = vmatmul.mubr.bf16.gmra.mxu0 %v1640
        %v1679 = vpop.f32.mrf.mxu0
        %v1680 = vadd.f32 0.0, %v1679
        %v1681 = vpop.f32.mrf.mxu0
        %v1682 = vpop.f32.mrf.mxu0
        %v1683 = vpop.f32.mrf.mxu0
        %1684 = vdwg.mxu0
        %v1686 = vsel %vm1293, %v1545, 0
        %v1689 = vsel %vm1549, %v1080, 0
        %1691 = vmatprep.subr.bf16.mxu0 0
        %1692 = vmatpush1.bf16.msra.mxu0 0
        %1693 = vmatprep.subr.bf16.mxu0 0
        %1694 = vmatpush1.bf16.msra.mxu0 0
        %1695 = vmatprep.subr.bf16.mxu0 0
        %1696 = vmatpush1.bf16.msra.mxu0 0
        %1697 = vmatprep.subr.bf16.mxu0 0
        %1698 = vmatpush1.bf16.msra.mxu0 0
        %1699 = vmatprep.subr.bf16.mxu0 0
        %1700 = vmatpush1.bf16.msra.mxu0 0
        %1701 = vmatprep.subr.bf16.mxu0 0
        %1702 = vmatpush1.bf16.msra.mxu0 0
        %1703 = vmatprep.subr.bf16.mxu0 0
        %1704 = vmatpush1.bf16.msra.mxu0 0
        %1705 = vmatprep.subr.bf16.mxu0 0
        %1706 = vmatpush1.bf16.msra.mxu0 %v1689
        %1707 = vmatprep.subr.bf16.mxu0 0
        %1708 = vmatpush2.bf16.msra.mxu0 0
        %1709 = vmatprep.subr.bf16.mxu0 0
        %1710 = vmatpush2.bf16.msra.mxu0 0
        %1711 = vmatprep.subr.bf16.mxu0 0
        %1712 = vmatpush2.bf16.msra.mxu0 0
        %1713 = vmatprep.subr.bf16.mxu0 0
        %1714 = vmatpush2.bf16.msra.mxu0 0
        %1715 = vmatprep.subr.bf16.mxu0 0
        %1716 = vmatpush2.bf16.msra.mxu0 0
        %1717 = vmatprep.subr.bf16.mxu0 0
        %1718 = vmatpush2.bf16.msra.mxu0 0
        %1719 = vmatprep.subr.bf16.mxu0 0
        %1720 = vmatpush2.bf16.msra.mxu0 0
        %1721 = vmatprep.subr.bf16.mxu0 0
        %1722 = vmatpush2.bf16.msra.mxu0 0
        %1723 = vmatprep.mubr.bf16.mxu0 0
        %1724 = vmatmul.mubr.bf16.gmra.mxu0 %v1686
        %v1725 = vpop.f32.mrf.mxu0
        %v1726 = vadd.f32 0.0, %v1725
        %v1727 = vpop.f32.mrf.mxu0
        %v1728 = vpop.f32.mrf.mxu0
        %v1729 = vpop.f32.mrf.mxu0
        %1730 = vdwg.mxu0
        %v1731 = vadd.f32 %v1522, %v1588
        %v1732 = vadd.f32 %v1523, %v1634
        %v1733 = vadd.f32 %v1524, %v1680
        %v1734 = vadd.f32 %v1525, %v1726
        %v1735 = vrcp.pop %v1538
        %v1736 = vrcp.pop %v1539
        %v1737 = vrcp.pop %v1540
        %v1738 = vrcp.pop %v1541
        %v1739 = vmul.f32 %v1731, %v1735
        %v1740 = vmul.f32 %v1732, %v1736
        %v1741 = vmul.f32 %v1733, %v1737
        %v1742 = vmul.f32 %v1734, %v1738
        %v1743 = vpack.c.bf16 %v1739, %v1739
        %v1744 = vpack.c.bf16 %v1740, %v1740
        %v1745 = vpack.c.bf16 %v1741, %v1741
        %v1746 = vpack.c.bf16 %v1742, %v1742
        %v1747 = vld [vmem:[%s8] sm:$0xf]
        %v1748 = vld [vmem:[%s8 + $0x4] sm:$0xf]
        %v1749 = vld [vmem:[%s8 + $0x8] sm:$0xf]
        %v1750 = vld [vmem:[%s8 + $0xc] sm:$0xf]
        %v1752 = vsel %vm1293, %v1743, 0
        %v1755 = vsel %vm1549, %v1747, 0
        %1757 = vmatprep.subr.bf16.mxu0 0
        %1758 = vmatpush1.bf16.msra.mxu0 0
        %1759 = vmatprep.subr.bf16.mxu0 0
        %1760 = vmatpush1.bf16.msra.mxu0 0
        %1761 = vmatprep.subr.bf16.mxu0 0
        %1762 = vmatpush1.bf16.msra.mxu0 0
        %1763 = vmatprep.subr.bf16.mxu0 0
        %1764 = vmatpush1.bf16.msra.mxu0 0
        %1765 = vmatprep.subr.bf16.mxu0 0
        %1766 = vmatpush1.bf16.msra.mxu0 0
        %1767 = vmatprep.subr.bf16.mxu0 0
        %1768 = vmatpush1.bf16.msra.mxu0 0
        %1769 = vmatprep.subr.bf16.mxu0 0
        %1770 = vmatpush1.bf16.msra.mxu0 0
        %1771 = vmatprep.subr.bf16.mxu0 0
        %1772 = vmatpush1.bf16.msra.mxu0 %v1755
        %1773 = vmatprep.subr.bf16.mxu0 0
        %1774 = vmatpush2.bf16.msra.mxu0 0
        %1775 = vmatprep.subr.bf16.mxu0 0
        %1776 = vmatpush2.bf16.msra.mxu0 0
        %1777 = vmatprep.subr.bf16.mxu0 0
        %1778 = vmatpush2.bf16.msra.mxu0 0
        %1779 = vmatprep.subr.bf16.mxu0 0
        %1780 = vmatpush2.bf16.msra.mxu0 0
        %1781 = vmatprep.subr.bf16.mxu0 0
        %1782 = vmatpush2.bf16.msra.mxu0 0
        %1783 = vmatprep.subr.bf16.mxu0 0
        %1784 = vmatpush2.bf16.msra.mxu0 0
        %1785 = vmatprep.subr.bf16.mxu0 0
        %1786 = vmatpush2.bf16.msra.mxu0 0
        %1787 = vmatprep.subr.bf16.mxu0 0
        %1788 = vmatpush2.bf16.msra.mxu0 0
        %1789 = vmatprep.mubr.bf16.mxu0 0
        %1790 = vmatmul.mubr.bf16.gmra.mxu0 %v1752
        %v1791 = vpop.f32.mrf.mxu0
        %v1792 = vadd.f32 0.0, %v1791
        %v1793 = vpop.f32.mrf.mxu0
        %v1794 = vpop.f32.mrf.mxu0
        %v1795 = vpop.f32.mrf.mxu0
        %1796 = vdwg.mxu0
        %v1798 = vsel %vm1293, %v1744, 0
        %v1801 = vsel %vm1549, %v1748, 0
        %1803 = vmatprep.subr.bf16.mxu0 0
        %1804 = vmatpush1.bf16.msra.mxu0 0
        %1805 = vmatprep.subr.bf16.mxu0 0
        %1806 = vmatpush1.bf16.msra.mxu0 0
        %1807 = vmatprep.subr.bf16.mxu0 0
        %1808 = vmatpush1.bf16.msra.mxu0 0
        %1809 = vmatprep.subr.bf16.mxu0 0
        %1810 = vmatpush1.bf16.msra.mxu0 0
        %1811 = vmatprep.subr.bf16.mxu0 0
        %1812 = vmatpush1.bf16.msra.mxu0 0
        %1813 = vmatprep.subr.bf16.mxu0 0
        %1814 = vmatpush1.bf16.msra.mxu0 0
        %1815 = vmatprep.subr.bf16.mxu0 0
        %1816 = vmatpush1.bf16.msra.mxu0 0
        %1817 = vmatprep.subr.bf16.mxu0 0
        %1818 = vmatpush1.bf16.msra.mxu0 %v1801
        %1819 = vmatprep.subr.bf16.mxu0 0
        %1820 = vmatpush2.bf16.msra.mxu0 0
        %1821 = vmatprep.subr.bf16.mxu0 0
        %1822 = vmatpush2.bf16.msra.mxu0 0
        %1823 = vmatprep.subr.bf16.mxu0 0
        %1824 = vmatpush2.bf16.msra.mxu0 0
        %1825 = vmatprep.subr.bf16.mxu0 0
        %1826 = vmatpush2.bf16.msra.mxu0 0
        %1827 = vmatprep.subr.bf16.mxu0 0
        %1828 = vmatpush2.bf16.msra.mxu0 0
        %1829 = vmatprep.subr.bf16.mxu0 0
        %1830 = vmatpush2.bf16.msra.mxu0 0
        %1831 = vmatprep.subr.bf16.mxu0 0
        %1832 = vmatpush2.bf16.msra.mxu0 0
        %1833 = vmatprep.subr.bf16.mxu0 0
        %1834 = vmatpush2.bf16.msra.mxu0 0
        %1835 = vmatprep.mubr.bf16.mxu0 0
        %1836 = vmatmul.mubr.bf16.gmra.mxu0 %v1798
        %v1837 = vpop.f32.mrf.mxu0
        %v1838 = vadd.f32 0.0, %v1837
        %v1839 = vpop.f32.mrf.mxu0
        %v1840 = vpop.f32.mrf.mxu0
        %v1841 = vpop.f32.mrf.mxu0
        %1842 = vdwg.mxu0
        %v1844 = vsel %vm1293, %v1745, 0
        %v1847 = vsel %vm1549, %v1749, 0
        %1849 = vmatprep.subr.bf16.mxu0 0
        %1850 = vmatpush1.bf16.msra.mxu0 0
        %1851 = vmatprep.subr.bf16.mxu0 0
        %1852 = vmatpush1.bf16.msra.mxu0 0
        %1853 = vmatprep.subr.bf16.mxu0 0
        %1854 = vmatpush1.bf16.msra.mxu0 0
        %1855 = vmatprep.subr.bf16.mxu0 0
        %1856 = vmatpush1.bf16.msra.mxu0 0
        %1857 = vmatprep.subr.bf16.mxu0 0
        %1858 = vmatpush1.bf16.msra.mxu0 0
        %1859 = vmatprep.subr.bf16.mxu0 0
        %1860 = vmatpush1.bf16.msra.mxu0 0
        %1861 = vmatprep.subr.bf16.mxu0 0
        %1862 = vmatpush1.bf16.msra.mxu0 0
        %1863 = vmatprep.subr.bf16.mxu0 0
        %1864 = vmatpush1.bf16.msra.mxu0 %v1847
        %1865 = vmatprep.subr.bf16.mxu0 0
        %1866 = vmatpush2.bf16.msra.mxu0 0
        %1867 = vmatprep.subr.bf16.mxu0 0
        %1868 = vmatpush2.bf16.msra.mxu0 0
        %1869 = vmatprep.subr.bf16.mxu0 0
        %1870 = vmatpush2.bf16.msra.mxu0 0
        %1871 = vmatprep.subr.bf16.mxu0 0
        %1872 = vmatpush2.bf16.msra.mxu0 0
        %1873 = vmatprep.subr.bf16.mxu0 0
        %1874 = vmatpush2.bf16.msra.mxu0 0
        %1875 = vmatprep.subr.bf16.mxu0 0
        %1876 = vmatpush2.bf16.msra.mxu0 0
        %1877 = vmatprep.subr.bf16.mxu0 0
        %1878 = vmatpush2.bf16.msra.mxu0 0
        %1879 = vmatprep.subr.bf16.mxu0 0
        %1880 = vmatpush2.bf16.msra.mxu0 0
        %1881 = vmatprep.mubr.bf16.mxu0 0
        %1882 = vmatmul.mubr.bf16.gmra.mxu0 %v1844
        %v1883 = vpop.f32.mrf.mxu0
        %v1884 = vadd.f32 0.0, %v1883
        %v1885 = vpop.f32.mrf.mxu0
        %v1886 = vpop.f32.mrf.mxu0
        %v1887 = vpop.f32.mrf.mxu0
        %1888 = vdwg.mxu0
        %v1890 = vsel %vm1293, %v1746, 0
        %v1893 = vsel %vm1549, %v1750, 0
        %1895 = vmatprep.subr.bf16.mxu0 0
        %1896 = vmatpush1.bf16.msra.mxu0 0
        %1897 = vmatprep.subr.bf16.mxu0 0
        %1898 = vmatpush1.bf16.msra.mxu0 0
        %1899 = vmatprep.subr.bf16.mxu0 0
        %1900 = vmatpush1.bf16.msra.mxu0 0
        %1901 = vmatprep.subr.bf16.mxu0 0
        %1902 = vmatpush1.bf16.msra.mxu0 0
        %1903 = vmatprep.subr.bf16.mxu0 0
        %1904 = vmatpush1.bf16.msra.mxu0 0
        %1905 = vmatprep.subr.bf16.mxu0 0
        %1906 = vmatpush1.bf16.msra.mxu0 0
        %1907 = vmatprep.subr.bf16.mxu0 0
        %1908 = vmatpush1.bf16.msra.mxu0 0
        %1909 = vmatprep.subr.bf16.mxu0 0
        %1910 = vmatpush1.bf16.msra.mxu0 %v1893
        %1911 = vmatprep.subr.bf16.mxu0 0
        %1912 = vmatpush2.bf16.msra.mxu0 0
        %1913 = vmatprep.subr.bf16.mxu0 0
        %1914 = vmatpush2.bf16.msra.mxu0 0
        %1915 = vmatprep.subr.bf16.mxu0 0
        %1916 = vmatpush2.bf16.msra.mxu0 0
        %1917 = vmatprep.subr.bf16.mxu0 0
        %1918 = vmatpush2.bf16.msra.mxu0 0
        %1919 = vmatprep.subr.bf16.mxu0 0
        %1920 = vmatpush2.bf16.msra.mxu0 0
        %1921 = vmatprep.subr.bf16.mxu0 0
        %1922 = vmatpush2.bf16.msra.mxu0 0
        %1923 = vmatprep.subr.bf16.mxu0 0
        %1924 = vmatpush2.bf16.msra.mxu0 0
        %1925 = vmatprep.subr.bf16.mxu0 0
        %1926 = vmatpush2.bf16.msra.mxu0 0
        %1927 = vmatprep.mubr.bf16.mxu0 0
        %1928 = vmatmul.mubr.bf16.gmra.mxu0 %v1890
        %v1929 = vpop.f32.mrf.mxu0
        %v1930 = vadd.f32 0.0, %v1929
        %v1931 = vpop.f32.mrf.mxu0
        %v1932 = vpop.f32.mrf.mxu0
        %v1933 = vpop.f32.mrf.mxu0
        %1934 = vdwg.mxu0
        %v1935 = vadd.f32 %v1792, %v1838
        %v1936 = vadd.f32 %v1935, %v1884
        %v1937 = vadd.f32 %v1936, %v1930
        %v1938 = vld [vmem:[%s9] sm:$0x1]
        %v1940 = vlaneseq
        %v1941 = vshrl.u32 %v1940, 7
        %v1942 = vsub.s32 0, %v1941
        %v1943 = vrot.slane %v1938, %v1942
        %v1945 = vadd.f32 %v1937, %v1943
        %v1946 = vadd.f32 %v622, %v1945
        %v1947 = vld [vmem:[%s16] sm:$0x1]
        %v1948 = vld [vmem:[%s17] sm:$0x1]
        %v1949 = vsel %vm625, %v1946, 0.0
        %1950 = vadd.xlane.f32.xlu0 %v1949
        %v1951 = vpop.xlane.xlu0 %1950
        %v1952 = vmul.f32 %v1951, %v629
        %v1953 = vsub.f32 %v1946, %v1952
        %v1954 = vmul.f32 %v1953, %v1953
        %v1955 = vsel %vm625, %v1954, 0.0
        %1956 = vadd.xlane.f32.xlu0 %v1955
        %v1957 = vpop.xlane.xlu0 %1956
        %v1958 = vmul.f32 %v1957, 0.032258064
        %v1959 = vrsqrt.pop %v1958
        %v1960 = vmul.f32 %v1958, %v1959
        %vm1961 = vcmp.eq.f32.partialorder %v1958, inf
        %v1962 = vsel %vm1961, %v1958, %v1960
        %vm1963 = vcmp.eq.f32.partialorder %v1958, 0.0
        %v1964 = vand.u32 %v1958, 2147483648
        %v1965 = vsel %vm1963, %v1964, %v1962
        %v1966 = vadd.f32 %v1965, 1e-06
        %v1967 = vrcp.pop %v1966
        %v1968 = vmul.f32 %v1953, %v1967
        %v1970 = vlaneseq
        %v1971 = vshrl.u32 %v1970, 7
        %v1972 = vsub.s32 0, %v1971
        %v1973 = vrot.slane %v1947, %v1972
        %v1975 = vmul.f32 %v1973, %v1968
        %v1977 = vlaneseq
        %v1978 = vshrl.u32 %v1977, 7
        %v1979 = vsub.s32 0, %v1978
        %v1980 = vrot.slane %v1948, %v1979
        %v1982 = vadd.f32 %v1975, %v1980
        %v1983 = vpack.c.bf16 %v1982, %v1982
        %v1984 = vld [vmem:[#allocation9] sm:$0xf]
        %v1985 = vld [vmem:[#allocation9 + $0x4] sm:$0xf]
        %v1986 = vld [vmem:[#allocation9 + $0x8] sm:$0xf]
        %v1987 = vld [vmem:[#allocation9 + $0xc] sm:$0xf]
        %v1988 = vld [vmem:[#allocation10] sm:$0x1]
        %v1990 = vlaneseq
        %v1991 = vshrl.u32 %v1990, 7
        %v1992 = vsub.s32 0, %v1991
        %v1993 = vrot.slane %v1988, %v1992
        %v1999 = vunpack.c.l.b16 %v1984
        %v2000 = vunpack.c.l.b16 %v1985
        %v2001 = vunpack.c.l.b16 %v1986
        %v2002 = vunpack.c.l.b16 %v1987
        %v2003 = vpack.c.b16 %v2000, %v1999
        %v2004 = vpack.c.b16 %v2002, %v2001
        %v2008 = vsel %vm625, %v1983, 0
        %2010 = vmatprep.subr.bf16.mxu0 0
        %2011 = vmatpush1.bf16.msra.mxu0 0
        %2012 = vmatprep.subr.bf16.mxu0 0
        %2013 = vmatpush1.bf16.msra.mxu0 0
        %2014 = vmatprep.subr.bf16.mxu0 0
        %2015 = vmatpush1.bf16.msra.mxu0 0
        %2016 = vmatprep.subr.bf16.mxu0 0
        %2017 = vmatpush1.bf16.msra.mxu0 0
        %2018 = vmatprep.subr.bf16.mxu0 0
        %2019 = vmatpush1.bf16.msra.mxu0 0
        %2020 = vmatprep.subr.bf16.mxu0 0
        %2021 = vmatpush1.bf16.msra.mxu0 0
        %2022 = vmatprep.subr.bf16.mxu0 0
        %2023 = vmatpush1.bf16.msra.mxu0 %v2004
        %2024 = vmatprep.subr.bf16.mxu0 0
        %2025 = vmatpush1.bf16.msra.mxu0 %v2003
        %2026 = vmatprep.subr.bf16.mxu0 0
        %2027 = vmatpush2.bf16.msra.mxu0 0
        %2028 = vmatprep.subr.bf16.mxu0 0
        %2029 = vmatpush2.bf16.msra.mxu0 0
        %2030 = vmatprep.subr.bf16.mxu0 0
        %2031 = vmatpush2.bf16.msra.mxu0 0
        %2032 = vmatprep.subr.bf16.mxu0 0
        %2033 = vmatpush2.bf16.msra.mxu0 0
        %2034 = vmatprep.subr.bf16.mxu0 0
        %2035 = vmatpush2.bf16.msra.mxu0 0
        %2036 = vmatprep.subr.bf16.mxu0 0
        %2037 = vmatpush2.bf16.msra.mxu0 0
        %2038 = vmatprep.subr.bf16.mxu0 0
        %2039 = vmatpush2.bf16.msra.mxu0 0
        %2040 = vmatprep.subr.bf16.mxu0 0
        %2041 = vmatpush2.bf16.msra.mxu0 0
        %2042 = vmatprep.mubr.bf16.mxu0 0
        %2043 = vmatmul.mubr.bf16.gmra.mxu0 %v2008
        %v2044 = vpop.f32.mrf.mxu0
        %v2045 = vadd.f32 %v1993, %v2044
        %v2046 = vpop.f32.mrf.mxu0
        %v2047 = vpop.f32.mrf.mxu0
        %v2048 = vpop.f32.mrf.mxu0
        %2049 = vdwg.mxu0
        %v2050 = vmul.f32 %v2045, 0.5
        %v2051 = vmul.f32 %v2045, 0.044715
        %v2052 = vmul.f32 %v2051, %v2045
        %v2053 = vmul.f32 %v2052, %v2045
        %v2054 = vadd.f32 %v2045, %v2053
        %v2055 = vmul.f32 %v2054, 0.7978846
        %v2056 = vtanh.pop %v2055
        %v2057 = vadd.f32 %v2056, 1.0
        %v2058 = vmul.f32 %v2050, %v2057
        %v2059 = vpack.c.bf16 %v2058, %v2058
        %v2060 = vld [vmem:[%s12] sm:$0xf]
        %v2061 = vld [vmem:[%s12 + $0x4] sm:$0xf]
        %v2062 = vld [vmem:[%s12 + $0x8] sm:$0xf]
        %v2063 = vld [vmem:[%s12 + $0xc] sm:$0xf]
        %v2064 = vld [vmem:[%s12 + $0x10] sm:$0xf]
        %v2065 = vld [vmem:[%s12 + $0x14] sm:$0xf]
        %v2066 = vld [vmem:[%s12 + $0x18] sm:$0xf]
        %v2067 = vld [vmem:[%s12 + $0x1c] sm:$0xf]
        %v2068 = vld [vmem:[%s12 + $0x20] sm:$0xf]
        %v2069 = vld [vmem:[%s12 + $0x24] sm:$0xf]
        %v2070 = vld [vmem:[%s12 + $0x28] sm:$0xf]
        %v2071 = vld [vmem:[%s12 + $0x2c] sm:$0xf]
        %v2072 = vld [vmem:[%s12 + $0x30] sm:$0xf]
        %v2073 = vld [vmem:[%s12 + $0x34] sm:$0xf]
        %v2074 = vld [vmem:[%s12 + $0x38] sm:$0xf]
        %v2075 = vld [vmem:[%s12 + $0x3c] sm:$0xf]
        %v2076 = vld [vmem:[%s13] sm:$0x1]
        %v2078 = vlaneseq
        %v2079 = vshrl.u32 %v2078, 7
        %v2080 = vsub.s32 0, %v2079
        %v2081 = vrot.slane %v2076, %v2080
        %v2099 = vunpack.c.l.b16 %v2060
        %v2100 = vunpack.c.l.b16 %v2061
        %v2101 = vunpack.c.l.b16 %v2062
        %v2102 = vunpack.c.l.b16 %v2063
        %v2103 = vunpack.c.l.b16 %v2064
        %v2104 = vunpack.c.l.b16 %v2065
        %v2105 = vunpack.c.l.b16 %v2066
        %v2106 = vunpack.c.l.b16 %v2067
        %v2107 = vunpack.c.l.b16 %v2068
        %v2108 = vunpack.c.l.b16 %v2069
        %v2109 = vunpack.c.l.b16 %v2070
        %v2110 = vunpack.c.l.b16 %v2071
        %v2111 = vunpack.c.l.b16 %v2072
        %v2112 = vunpack.c.l.b16 %v2073
        %v2113 = vunpack.c.l.b16 %v2074
        %v2114 = vunpack.c.l.b16 %v2075
        %v2115 = vpack.c.b16 %v2100, %v2099
        %v2116 = vpack.c.b16 %v2102, %v2101
        %v2117 = vpack.c.b16 %v2104, %v2103
        %v2118 = vpack.c.b16 %v2106, %v2105
        %v2119 = vpack.c.b16 %v2108, %v2107
        %v2120 = vpack.c.b16 %v2110, %v2109
        %v2121 = vpack.c.b16 %v2112, %v2111
        %v2122 = vpack.c.b16 %v2114, %v2113
        %2131 = vmatprep.subr.bf16.mxu0 0
        %2132 = vmatpush1.bf16.msra.mxu0 %v2122
        %2133 = vmatprep.subr.bf16.mxu0 0
        %2134 = vmatpush1.bf16.msra.mxu0 %v2121
        %2135 = vmatprep.subr.bf16.mxu0 0
        %2136 = vmatpush1.bf16.msra.mxu0 %v2120
        %2137 = vmatprep.subr.bf16.mxu0 0
        %2138 = vmatpush1.bf16.msra.mxu0 %v2119
        %2139 = vmatprep.subr.bf16.mxu0 0
        %2140 = vmatpush1.bf16.msra.mxu0 %v2118
        %2141 = vmatprep.subr.bf16.mxu0 0
        %2142 = vmatpush1.bf16.msra.mxu0 %v2117
        %2143 = vmatprep.subr.bf16.mxu0 0
        %2144 = vmatpush1.bf16.msra.mxu0 %v2116
        %2145 = vmatprep.subr.bf16.mxu0 0
        %2146 = vmatpush1.bf16.msra.mxu0 %v2115
        %2147 = vmatprep.subr.bf16.mxu0 0
        %2148 = vmatpush2.bf16.msra.mxu0 0
        %2149 = vmatprep.subr.bf16.mxu0 0
        %2150 = vmatpush2.bf16.msra.mxu0 0
        %2151 = vmatprep.subr.bf16.mxu0 0
        %2152 = vmatpush2.bf16.msra.mxu0 0
        %2153 = vmatprep.subr.bf16.mxu0 0
        %2154 = vmatpush2.bf16.msra.mxu0 0
        %2155 = vmatprep.subr.bf16.mxu0 0
        %2156 = vmatpush2.bf16.msra.mxu0 0
        %2157 = vmatprep.subr.bf16.mxu0 0
        %2158 = vmatpush2.bf16.msra.mxu0 0
        %2159 = vmatprep.subr.bf16.mxu0 0
        %2160 = vmatpush2.bf16.msra.mxu0 0
        %2161 = vmatprep.subr.bf16.mxu0 0
        %2162 = vmatpush2.bf16.msra.mxu0 0
        %2163 = vmatprep.mubr.bf16.mxu0 0
        %2164 = vmatmul.mubr.bf16.gmra.mxu0 %v2059
        %v2165 = vpop.f32.mrf.mxu0
        %v2166 = vadd.f32 %v2081, %v2165
        %v2167 = vpop.f32.mrf.mxu0
        %v2168 = vpop.f32.mrf.mxu0
        %v2169 = vpop.f32.mrf.mxu0
        %2170 = vdwg.mxu0
        %v2171 = vadd.f32 %v1946, %v2166
        %2172 = vst.msk [vmem:[%s615] sm:$0xff] %vm625, %v2171
        %s2173 = sand.u32 %s423, 1
        %s2174 = scalar_lea.sflag [#allocation6], %s2173
        %s2175 = sand.u32 %s423, 1
        %s2176 = smul.addr %s2175, 8
        %s2177 = scalar_lea.vmem [#allocation12], %s2176
        // Predicated region
        $region105: #{tpu_custom_call.1} parent=87 // pred_check
          %p2178 = pneg %p433
        $region106: #{tpu_custom_call.1} parent=87 // pred_check_branch
          %2180 = sbr.rel (%p2178) target = $region108
        $region107: #{tpu_custom_call.1} parent=87 // pred_region
          %s2182 = ssub.s32 128, 128
          %2183 = vsyncadd %s2174, %s2182
          %s2184 = sadd.s32 %s44, %s43
          %s2185 = smul.addr %s2184, 128
          %s2186 = scalar_lea.hbm %s18, %s2185
          %s2188 = sshll.u32 %s2177, 4
          %s2189 = int_to_ptr.vmem [resolvable:$true] %s2188
          %2191 = dma.vmem_to_hbm [thread:$0]  %s2189, 128, %s2186, %s2174
        $region108: #{tpu_custom_call.1} parent=87 // pred_fallthru
          _
      $region88: #{tpu_custom_call.1} parent=5 // pred_fallthru
        _
      %p2192 = scmp.le.s32.totalorder 2, %s34
      // Predicated region
      $region109: #{tpu_custom_call.1} parent=5 // pred_check
        %p2193 = pneg %p2192
      $region110: #{tpu_custom_call.1} parent=5 // pred_check_branch
        %2195 = sbr.rel (%p2193) target = $region112
      $region111: #{tpu_custom_call.1} parent=5 // pred_region
        %s2196 = ssub.s32 %s34, 2
        // Predicated region
        $region113: #{tpu_custom_call.1} parent=111 // pred_check
          %p2197 = pneg %p439
        $region114: #{tpu_custom_call.1} parent=111 // pred_check_branch
          %2199 = sbr.rel (%p2197) target = $region116
        $region115: #{tpu_custom_call.1} parent=111 // pred_region
          %s2200 = sand.u32 %s424, 1
          %s2201 = scalar_lea.sflag [#allocation6], %s2200
          %s2202 = sand.u32 %s424, 1
          %s2203 = smul.addr %s2202, 8
          %s2204 = scalar_lea.vmem [#allocation12], %s2203
          %2205 = dma.done %s2201, 128
        $region116: #{tpu_custom_call.1} parent=111 // pred_fallthru
          _
      $region112: #{tpu_custom_call.1} parent=5 // pred_fallthru
        _
    $region6: #{tpu_custom_call.1} parent=1 // loop_footer
      %s38 = sadd.s32 1, %s34
    $region7: #{tpu_custom_call.1} parent=1 // loop_footer_branch
      %33 = sbr.rel target = $region3
    $region8: #{tpu_custom_call.1} parent=1 // loop_exit
      _
    %2206 = vsyncpa [#allocation5], 1
    %s2207 = scalar_lea.sflag [#allocation5], 1
    %2208 = vsyncpa %s2207, 1
    %2209 = vsyncpa [#allocation8], 1
    %2210 = vsyncpa [#allocation11], 1
    %2211 = vsyncpa [#allocation6], 1
    %s2212 = scalar_lea.sflag [#allocation6], 1
    %2213 = vsyncpa %s2212, 1

</llo_original>
